<compile_context>
chip_gen: v6e
topology: v6e:2x2x1
jax: 0.10.0
libtpu: 0.0.40
codegen_flags: <defaults>
</compile_context>

<pallas_src>
import jax
import jax.numpy as jnp
from jax import lax
from jax.experimental import pallas as pl
from jax.experimental.pallas import tpu as pltpu


def _round_up(x, m):
    return ((x + m - 1) // m) * m


def _pick_row_tile(h, target=64):
    """Largest divisor of h that is <= target and leaves >= 2 row tiles."""
    cands = [d for d in range(1, h + 1)
             if h % d == 0 and d <= target and h // d >= 2]
    return max(cands) if cands else h


def bisenet_output_kernel(x_ref, w1_ref, b1_ref, w2_ref, b2_ref, o_ref):
    """Grid: (batch, row_tile). One (TH, W) spatial tile per step.

    x_ref : (1, H+2, W+2, Cin)  bf16 zero-padded NHWC input (whole image,
                                 resident across the row-tile grid axis)
    w1_ref: (9*Cin, Cmid_p)     bf16 BN-folded 3x3 weights, im2col layout
    b1_ref: (1, Cmid_p)         f32  BN-folded bias (zero padded)
    w2_ref: (Cmid_p, Cout_p)    bf16 1x1 conv weights (zero padded)
    b2_ref: (1, Cout_p)         f32  1x1 conv bias (zero padded)
    o_ref : (1, TH, W, Cout_p)  f32  lane-dense output tile (Cout padded to 128)
    """
    TH = o_ref.shape[1]
    W = o_ref.shape[2]
    Cin = x_ref.shape[3]
    Cout_p = o_ref.shape[3]

    h = pl.program_id(1)
    r0 = pl.multiple_of(h * TH, TH)

    # im2col: gather the 9 shifted taps once, then a single MXU matmul with
    # K = 9*Cin (instead of 9 tiny K=Cin matmuls, each mostly pushing zeros).
    cols = []
    for ky in range(3):
        slab = x_ref[0, pl.ds(r0 + ky, TH), :, :].astype(jnp.float32)  # (TH, W+2, Cin)
        for kx in range(3):
            cols.append(slab[:, kx:kx + W, :].reshape(TH * W, Cin))
    patch = jnp.concatenate(cols, axis=-1).astype(jnp.bfloat16)        # (TH*W, 9*Cin)

    acc = jnp.dot(patch, w1_ref[...], preferred_element_type=jnp.float32)
    hid = jnp.maximum(acc + b1_ref[...], 0.0)                          # f32 elementwise

    out = jnp.dot(hid.astype(jnp.bfloat16), w2_ref[...],
                  preferred_element_type=jnp.float32) + b2_ref[...]

    # W is a multiple of 8 here, so this reshape is layout-free; the 128-wide
    # last dim keeps the store lane-dense.
    o_ref[...] = out.reshape(1, TH, W, Cout_p).astype(o_ref.dtype)


@jax.jit
def bisenet_output(x_nchw, params):
    """Forward pass equivalent to BiSeNetOutput(in_chan, mid_chan, out_chan)."""
    w_conv = params["w_conv"]          # (Cmid, Cin, 3, 3)  OIHW, no bias
    gamma = params["bn_gamma"]
    beta = params["bn_beta"]
    mean = params["bn_mean"]
    var = params["bn_var"]
    eps = params["bn_eps"]
    w_out = params["w_out"]            # (Cout, Cmid, 1, 1)
    b_out = params["b_out"]            # (Cout,)

    Cmid, Cin = w_conv.shape[0], w_conv.shape[1]
    Cout = w_out.shape[0]
    N, _, H, W = x_nchw.shape

    Cmid_p = _round_up(Cmid, 128)      # lane-dense intermediate
    Cout_p = _round_up(Cout, 128)      # lane-dense output store
    TH = _pick_row_tile(H)             # spatial row tile (divisor of H)

    # Fold BN (inference mode) into the 3x3 conv; lay out weights for im2col:
    # feature index = (ky*3 + kx) * Cin + cin, matching the kernel's concat.
    scale = gamma / jnp.sqrt(var + eps)                     # (Cmid,)
    w1 = w_conv * scale[:, None, None, None]                # (Cmid, Cin, 3, 3)
    w1 = jnp.transpose(w1, (2, 3, 1, 0)).reshape(9 * Cin, Cmid)
    b1 = beta - mean * scale                                # (Cmid,)
    w2 = jnp.transpose(w_out[:, :, 0, 0], (1, 0))           # (Cmid, Cout)

    # Zero-pad channel dims to 128 lanes (extra channels stay exactly zero).
    w1_p = jnp.zeros((9 * Cin, Cmid_p), jnp.bfloat16).at[:, :Cmid].set(
        w1.astype(jnp.bfloat16))
    b1_p = jnp.zeros((1, Cmid_p), jnp.float32).at[:, :Cmid].set(b1)
    w2_p = jnp.zeros((Cmid_p, Cout_p), jnp.bfloat16).at[:Cmid, :Cout].set(
        w2.astype(jnp.bfloat16))
    b2_p = jnp.zeros((1, Cout_p), jnp.float32).at[:, :Cout].set(b_out)

    # NCHW -> NHWC, spatial pad (padding=1), bf16 for HBM traffic / MXU.
    x = jnp.transpose(x_nchw, (0, 2, 3, 1)).astype(jnp.bfloat16)
    xp = jnp.pad(x, ((0, 0), (1, 1), (1, 1), (0, 0)))

    out_p = pl.pallas_call(
        bisenet_output_kernel,
        out_shape=jax.ShapeDtypeStruct((N, H, W, Cout_p), jnp.float32),
        grid_spec=pltpu.PrefetchScalarGridSpec(
            num_scalar_prefetch=0,
            grid=(N, H // TH),
            in_specs=[
                pl.BlockSpec((1, H + 2, W + 2, Cin), lambda n, h: (n, 0, 0, 0)),
                pl.BlockSpec((9 * Cin, Cmid_p), lambda n, h: (0, 0)),
                pl.BlockSpec((1, Cmid_p), lambda n, h: (0, 0)),
                pl.BlockSpec((Cmid_p, Cout_p), lambda n, h: (0, 0)),
                pl.BlockSpec((1, Cout_p), lambda n, h: (0, 0)),
            ],
            out_specs=pl.BlockSpec((1, TH, W, Cout_p), lambda n, h: (n, h, 0, 0)),
        ),
        compiler_params=pltpu.CompilerParams(
            dimension_semantics=("parallel", "parallel"),
            vmem_limit_bytes=32 * 1024 * 1024),
    )(xp, w1_p, b1_p, w2_p, b2_p)

    # Slice off the lane padding, back to NCHW to match PyTorch convention.
    out_nhwc = out_p[..., :Cout]
    return jnp.transpose(out_nhwc, (0, 3, 1, 2))


def reference_forward(x_nchw, params):
    """Pure-JAX reference (lax.conv) for correctness checking."""
    y = lax.conv_general_dilated(
        x_nchw.astype(jnp.float32), params["w_conv"],
        window_strides=(1, 1), padding=((1, 1), (1, 1)),
        dimension_numbers=("NCHW", "OIHW", "NCHW"))
    inv = 1.0 / jnp.sqrt(params["bn_var"] + params["bn_eps"])
    y = (y - params["bn_mean"][None, :, None, None]) * inv[None, :, None, None]
    y = y * params["bn_gamma"][None, :, None, None] + params["bn_beta"][None, :, None, None]
    y = jnp.maximum(y, 0.0)
    z = lax.conv_general_dilated(
        y, params["w_out"],
        window_strides=(1, 1), padding=((0, 0), (0, 0)),
        dimension_numbers=("NCHW", "OIHW", "NCHW"))
    return z + params["b_out"][None, :, None, None]


def make_params(key, in_chan, mid_chan, out_chan):
    ks = jax.random.split(key, 6)
    return {
        "w_conv": 0.1 * jax.random.normal(ks[0], (mid_chan, in_chan, 3, 3), jnp.float32),
        "bn_gamma": 1.0 + 0.05 * jax.random.normal(ks[1], (mid_chan,), jnp.float32),
        "bn_beta": 0.05 * jax.random.normal(ks[2], (mid_chan,), jnp.float32),
        "bn_mean": 0.1 * jax.random.normal(ks[3], (mid_chan,), jnp.float32),
        "bn_var": jnp.abs(1.0 + 0.1 * jax.random.normal(ks[4], (mid_chan,), jnp.float32)),
        "bn_eps": 1e-5,
        "w_out": 0.1 * jax.random.normal(ks[5], (out_chan, mid_chan, 1, 1), jnp.float32),
        "b_out": 0.01 * jnp.arange(out_chan, dtype=jnp.float32),
    }


if __name__ == "__main__":
    N, IN_CHAN, MID_CHAN, OUT_CHAN, H, W = 2, 4, 8, 4, 16, 16

    key = jax.random.PRNGKey(0)
    k_x, k_p = jax.random.split(key)
    x = jax.random.normal(k_x, (N, IN_CHAN, H, W), jnp.float32)   # NCHW like torch
    params = make_params(k_p, IN_CHAN, MID_CHAN, OUT_CHAN)

    out = jax.block_until_ready(bisenet_output(x, params))
    ref = jax.block_until_ready(reference_forward(x, params))

    assert out.shape == (N, OUT_CHAN, H, W)
    max_err = float(jnp.max(jnp.abs(out - ref)))
    # bf16 inputs/weights (f32 accumulation) => loosened tolerance vs f32 ref.
    assert max_err < 3e-2, f"max abs err {max_err}"

    print("KERNEL_OK")
</pallas_src>

<mosaic_0001>
module attributes {stable_mosaic.version = 11 : i64} {
  func.func @bisenet_output_kernel(%arg0: i32, %arg1: i32, %arg2: memref<1x18x18x4xbf16, #tpu.memory_space<vmem>>, %arg3: memref<36x128xbf16, #tpu.memory_space<vmem>>, %arg4: memref<1x128xf32, #tpu.memory_space<vmem>>, %arg5: memref<128x128xbf16, #tpu.memory_space<vmem>>, %arg6: memref<1x128xf32, #tpu.memory_space<vmem>>, %arg7: memref<1x8x16x128xf32, #tpu.memory_space<vmem>>) attributes {dimension_semantics = [#tpu.dimension_semantics<parallel>, #tpu.dimension_semantics<parallel>], iteration_bounds = array<i64: 2, 2>, scalar_prefetch = 0 : i64, scratch_operands = 0 : i64, tpu.core_type = #tpu.core_type<tc>, window_params = [{transform_indices = @transform_0, window_bounds = array<i64: 1, 18, 18, 4>}, {pipeline_mode = #tpu.pipeline_mode<synchronous>, transform_indices = @transform_1, window_bounds = array<i64: 36, 128>}, {pipeline_mode = #tpu.pipeline_mode<synchronous>, transform_indices = @transform_2, window_bounds = array<i64: 1, 128>}, {pipeline_mode = #tpu.pipeline_mode<synchronous>, transform_indices = @transform_3, window_bounds = array<i64: 128, 128>}, {pipeline_mode = #tpu.pipeline_mode<synchronous>, transform_indices = @transform_4, window_bounds = array<i64: 1, 128>}, {transform_indices = @transform_5, window_bounds = array<i64: 1, 8, 16, 128>}]} {
    %c8_i32 = arith.constant 8 : i32
    %0 = arith.muli %arg1, %c8_i32 : i32
    %1 = tpu.assume_multiple %0, 8 : i32
    %c0_i32 = arith.constant 0 : i32
    %2 = arith.addi %1, %c0_i32 : i32
    %c0 = arith.constant 0 : index
    %3 = arith.index_cast %2 : i32 to index
    %c0_0 = arith.constant 0 : index
    %c0_1 = arith.constant 0 : index
    %4 = vector.load %arg2[%c0, %3, %c0_0, %c0_1] : memref<1x18x18x4xbf16, #tpu.memory_space<vmem>>, vector<1x8x18x4xbf16>
    %5 = vector.shape_cast %4 : vector<1x8x18x4xbf16> to vector<8x18x4xbf16>
    %6 = arith.extf %5 : vector<8x18x4xbf16> to vector<8x18x4xf32>
    %7 = vector.extract_strided_slice %6 {offsets = [0, 0, 0], sizes = [8, 16, 4], strides = [1, 1, 1]} : vector<8x18x4xf32> to vector<8x16x4xf32>
    %8 = vector.shape_cast %7 : vector<8x16x4xf32> to vector<128x4xf32>
    %9 = vector.extract_strided_slice %6 {offsets = [0, 1, 0], sizes = [8, 16, 4], strides = [1, 1, 1]} : vector<8x18x4xf32> to vector<8x16x4xf32>
    %10 = vector.shape_cast %9 : vector<8x16x4xf32> to vector<128x4xf32>
    %11 = vector.extract_strided_slice %6 {offsets = [0, 2, 0], sizes = [8, 16, 4], strides = [1, 1, 1]} : vector<8x18x4xf32> to vector<8x16x4xf32>
    %12 = vector.shape_cast %11 : vector<8x16x4xf32> to vector<128x4xf32>
    %c1_i32 = arith.constant 1 : i32
    %13 = arith.addi %1, %c1_i32 : i32
    %c0_2 = arith.constant 0 : index
    %14 = arith.index_cast %13 : i32 to index
    %c0_3 = arith.constant 0 : index
    %c0_4 = arith.constant 0 : index
    %15 = vector.load %arg2[%c0_2, %14, %c0_3, %c0_4] : memref<1x18x18x4xbf16, #tpu.memory_space<vmem>>, vector<1x8x18x4xbf16>
    %16 = vector.shape_cast %15 : vector<1x8x18x4xbf16> to vector<8x18x4xbf16>
    %17 = arith.extf %16 : vector<8x18x4xbf16> to vector<8x18x4xf32>
    %18 = vector.extract_strided_slice %17 {offsets = [0, 0, 0], sizes = [8, 16, 4], strides = [1, 1, 1]} : vector<8x18x4xf32> to vector<8x16x4xf32>
    %19 = vector.shape_cast %18 : vector<8x16x4xf32> to vector<128x4xf32>
    %20 = vector.extract_strided_slice %17 {offsets = [0, 1, 0], sizes = [8, 16, 4], strides = [1, 1, 1]} : vector<8x18x4xf32> to vector<8x16x4xf32>
    %21 = vector.shape_cast %20 : vector<8x16x4xf32> to vector<128x4xf32>
    %22 = vector.extract_strided_slice %17 {offsets = [0, 2, 0], sizes = [8, 16, 4], strides = [1, 1, 1]} : vector<8x18x4xf32> to vector<8x16x4xf32>
    %23 = vector.shape_cast %22 : vector<8x16x4xf32> to vector<128x4xf32>
    %c2_i32 = arith.constant 2 : i32
    %24 = arith.addi %1, %c2_i32 : i32
    %c0_5 = arith.constant 0 : index
    %25 = arith.index_cast %24 : i32 to index
    %c0_6 = arith.constant 0 : index
    %c0_7 = arith.constant 0 : index
    %26 = vector.load %arg2[%c0_5, %25, %c0_6, %c0_7] : memref<1x18x18x4xbf16, #tpu.memory_space<vmem>>, vector<1x8x18x4xbf16>
    %27 = vector.shape_cast %26 : vector<1x8x18x4xbf16> to vector<8x18x4xbf16>
    %28 = arith.extf %27 : vector<8x18x4xbf16> to vector<8x18x4xf32>
    %29 = vector.extract_strided_slice %28 {offsets = [0, 0, 0], sizes = [8, 16, 4], strides = [1, 1, 1]} : vector<8x18x4xf32> to vector<8x16x4xf32>
    %30 = vector.shape_cast %29 : vector<8x16x4xf32> to vector<128x4xf32>
    %31 = vector.extract_strided_slice %28 {offsets = [0, 1, 0], sizes = [8, 16, 4], strides = [1, 1, 1]} : vector<8x18x4xf32> to vector<8x16x4xf32>
    %32 = vector.shape_cast %31 : vector<8x16x4xf32> to vector<128x4xf32>
    %33 = vector.extract_strided_slice %28 {offsets = [0, 2, 0], sizes = [8, 16, 4], strides = [1, 1, 1]} : vector<8x18x4xf32> to vector<8x16x4xf32>
    %34 = vector.shape_cast %33 : vector<8x16x4xf32> to vector<128x4xf32>
    %35 = tpu.concatenate %8, %10, %12, %19, %21, %23, %30, %32, %34 in 1 : vector<128x4xf32>, vector<128x4xf32>, vector<128x4xf32>, vector<128x4xf32>, vector<128x4xf32>, vector<128x4xf32>, vector<128x4xf32>, vector<128x4xf32>, vector<128x4xf32> -> vector<128x36xf32>
    %36 = arith.truncf %35 : vector<128x36xf32> to vector<128x36xbf16>
    %c0_8 = arith.constant 0 : index
    %c0_9 = arith.constant 0 : index
    %37 = vector.load %arg3[%c0_8, %c0_9] : memref<36x128xbf16, #tpu.memory_space<vmem>>, vector<36x128xbf16>
    %cst = arith.constant dense<0.000000e+00> : vector<128x128xf32>
    %38 = tpu.matmul %36, %37, %cst {dimension_numbers = #tpu.dot_dimension_numbers<[1], [0], [0], [1], [0, 0, 1, 1], [], []>} : vector<128x36xbf16>, vector<36x128xbf16>, vector<128x128xf32> -> vector<128x128xf32>
    %c0_10 = arith.constant 0 : index
    %c0_11 = arith.constant 0 : index
    %39 = vector.load %arg4[%c0_10, %c0_11] : memref<1x128xf32, #tpu.memory_space<vmem>>, vector<1x128xf32>
    %40 = vector.broadcast %39 : vector<1x128xf32> to vector<128x128xf32>
    %41 = arith.addf %38, %40 : vector<128x128xf32>
    %cst_12 = arith.constant 0.000000e+00 : f32
    %42 = vector.broadcast %cst_12 : f32 to vector<128x128xf32>
    %43 = arith.maximumf %41, %42 : vector<128x128xf32>
    %44 = arith.truncf %43 : vector<128x128xf32> to vector<128x128xbf16>
    %c0_13 = arith.constant 0 : index
    %c0_14 = arith.constant 0 : index
    %45 = vector.load %arg5[%c0_13, %c0_14] : memref<128x128xbf16, #tpu.memory_space<vmem>>, vector<128x128xbf16>
    %cst_15 = arith.constant dense<0.000000e+00> : vector<128x128xf32>
    %46 = tpu.matmul %44, %45, %cst_15 {dimension_numbers = #tpu.dot_dimension_numbers<[1], [0], [0], [1], [0, 0, 1, 1], [], []>} : vector<128x128xbf16>, vector<128x128xbf16>, vector<128x128xf32> -> vector<128x128xf32>
    %c0_16 = arith.constant 0 : index
    %c0_17 = arith.constant 0 : index
    %47 = vector.load %arg6[%c0_16, %c0_17] : memref<1x128xf32, #tpu.memory_space<vmem>>, vector<1x128xf32>
    %48 = vector.broadcast %47 : vector<1x128xf32> to vector<128x128xf32>
    %49 = arith.addf %46, %48 : vector<128x128xf32>
    %50 = vector.shape_cast %49 : vector<128x128xf32> to vector<1x8x16x128xf32>
    %c0_18 = arith.constant 0 : index
    %c0_19 = arith.constant 0 : index
    %c0_20 = arith.constant 0 : index
    %c0_21 = arith.constant 0 : index
    %51 = vector.load %arg7[%c0_18, %c0_19, %c0_20, %c0_21] : memref<1x8x16x128xf32, #tpu.memory_space<vmem>>, vector<1x8x16x128xf32>
    tpu.vector_store %arg7[%c0_18, %c0_19, %c0_20, %c0_21], %50 {strides = array<i32>} : memref<1x8x16x128xf32, #tpu.memory_space<vmem>>, vector<1x8x16x128xf32>,
    return
  }
  func.func @transform_0(%arg0: i32, %arg1: i32) -> (i32, i32, i32, i32) {
    %c0_i32 = arith.constant 0 : i32
    %c0_i32_0 = arith.constant 0 : i32
    %c0_i32_1 = arith.constant 0 : i32
    %c0_i32_2 = arith.constant 0 : i32
    return %arg0, %c0_i32, %c0_i32_0, %c0_i32_1 : i32, i32, i32, i32
  }
  func.func @transform_1(%arg0: i32, %arg1: i32) -> (i32, i32) {
    %c0_i32 = arith.constant 0 : i32
    %c0_i32_0 = arith.constant 0 : i32
    %c0_i32_1 = arith.constant 0 : i32
    return %c0_i32, %c0_i32_0 : i32, i32
  }
  func.func @transform_2(%arg0: i32, %arg1: i32) -> (i32, i32) {
    %c0_i32 = arith.constant 0 : i32
    %c0_i32_0 = arith.constant 0 : i32
    %c0_i32_1 = arith.constant 0 : i32
    return %c0_i32, %c0_i32_0 : i32, i32
  }
  func.func @transform_3(%arg0: i32, %arg1: i32) -> (i32, i32) {
    %c0_i32 = arith.constant 0 : i32
    %c0_i32_0 = arith.constant 0 : i32
    %c0_i32_1 = arith.constant 0 : i32
    return %c0_i32, %c0_i32_0 : i32, i32
  }
  func.func @transform_4(%arg0: i32, %arg1: i32) -> (i32, i32) {
    %c0_i32 = arith.constant 0 : i32
    %c0_i32_0 = arith.constant 0 : i32
    %c0_i32_1 = arith.constant 0 : i32
    return %c0_i32, %c0_i32_0 : i32, i32
  }
  func.func @transform_5(%arg0: i32, %arg1: i32) -> (i32, i32, i32, i32) {
    %c0_i32 = arith.constant 0 : i32
    %c0_i32_0 = arith.constant 0 : i32
    %c0_i32_1 = arith.constant 0 : i32
    return %arg0, %arg1, %c0_i32, %c0_i32_0 : i32, i32, i32, i32
  }
}

</mosaic_0001>

<llo_original>
// kernel: bisenet_output.1
$region0: #{bisenet_output.1}
  #allocation0 [shape = 'u32[]', space=smem, size = 0x4, offset = 0x4, fixed_abs, tag = 'smem constant byte address 0x4 - core index']
  #allocation1 [shape = 'u32[144,128]{1,0:T(1,128)}', space=vmem, size = 0x12000, scoped, tag = 'internal scratch']
  %s0 = inlined_call_operand.vmem [shape: bf16[2,18,18,4], index: 0, kind: input, shape index: {}]
  %s1 = inlined_call_operand.vmem [shape: bf16[36,128], index: 1, kind: input, shape index: {}]
  %s2 = inlined_call_operand.vmem [shape: f32[1,128], index: 2, kind: input, shape index: {}]
  %s3 = inlined_call_operand.vmem [shape: bf16[128,128], index: 3, kind: input, shape index: {}]
  %s4 = inlined_call_operand.vmem [shape: f32[1,128], index: 4, kind: input, shape index: {}]
  %s5 = inlined_call_operand.vmem [shape: f32[2,16,16,128], index: 5, kind: output, shape index: {}]
  %s6 = sld [smem:[#allocation0]]
  $region53: #{bisenet_output.1} parent=0
    _
  %s8 = ssub.s32 1, %s6
  %s9 = scalar_select 0, %s8, %s6
  loop: start=0, step=1, limit=6
  $region2: #{bisenet_output.1} parent=0 // loop_pre_header
    _
  $region3: #{bisenet_output.1} parent=0 // loop_header
    %s11 = sphi 0, %s15
    %p12 = scmp.ge.s32.totalorder %s11, 6
    %s18 = sphi 0, %s30
    %s19 = sphi 0, %s26
    %s20 = sphi 0, %s18
    %s21 = sphi 0, %s19
    %s22 = sphi 0, %s20
    %s23 = sphi 0, %s21
    %s33 = sphi 0, %s35
    %s36 = sphi 0, %s33
    %s37 = sphi 0, %s36
    %s53 = sphi 0, %s37
    %s57 = sphi 0, %s57
    %s59 = sphi 0, %s57
    %s60 = sphi 0, %s59
    %s74 = sphi 0, %s60
    %s78 = sphi 0, %s78
    %s80 = sphi 0, %s78
    %s81 = sphi 0, %s80
    %s95 = sphi 0, %s81
    %s99 = sphi 0, %s99
    %s101 = sphi 0, %s99
    %s102 = sphi 0, %s101
    %s116 = sphi 0, %s102
    %s120 = sphi 0, %s120
    %s122 = sphi 0, %s120
    %s123 = sphi 0, %s122
    %s137 = sphi 0, %s123
    %s145 = sphi 0, %s147
    %s148 = sphi 0, %s145
    %s149 = sphi 0, %s148
    %s165 = sphi 0, %s149
  $region4: #{bisenet_output.1} parent=0 // loop_header_branch
    %14 = sbr.rel (%p12) target = $region8
  $region5: #{bisenet_output.1} parent=0 // loop_body
    %s16 = ssub.s32 %s11, 1
    %s17 = ssub.s32 %s11, 2
    %s24 = sadd.s32 1, %s19
    %p25 = scmp.ge.s32.totalorder %s24, 2
    %s26 = scalar_select %p25, 0, %s24
    %s27 = sadd.s32 1, %s18
    %s28 = scalar_select %p25, %s27, %s18
    %p29 = scmp.ge.s32.totalorder %s28, 2
    %s30 = scalar_select %p29, 0, %s28
    %s31 = ssub.s32 %s18, %s30
    %p32 = scmp.eq.s32.totalorder %s31, 0
    %s34 = sadd.s32 %s33, 1
    %s35 = scalar_select %p32, %s33, %s34
    %p38 = pneg %p32
    %p39 = scmp.eq.s32.totalorder %s11, 3
    %p40 = por %p38, %p39
    %p41 = scmp.ne.s32.totalorder %s33, %s36
    %p42 = scmp.eq.s32.totalorder %s11, 0
    %p43 = por %p41, %p42
    %p44 = scmp.ne.s32.totalorder %s33, %s36
    %p45 = scmp.eq.s32.totalorder %s16, 3
    %p46 = por %p44, %p45
    %p47 = scmp.ne.s32.totalorder %s36, %s37
    %p48 = scmp.eq.s32.totalorder %s16, 0
    %p49 = por %p47, %p48
    %p50 = scmp.ne.s32.totalorder %s36, %s37
    %p51 = scmp.eq.s32.totalorder %s17, 3
    %p52 = por %p50, %p51
    %p54 = scmp.ne.s32.totalorder %s37, %s53
    %p55 = scmp.eq.s32.totalorder %s17, 0
    %p56 = por %p54, %p55
    %s58 = sadd.s32 %s57, 1
    %p61 = scmp.eq.s32.totalorder %s11, 3
    %p62 = scmp.ne.s32.totalorder %s57, %s59
    %p63 = scmp.eq.s32.totalorder %s11, 0
    %p64 = por %p62, %p63
    %p65 = scmp.ne.s32.totalorder %s57, %s59
    %p66 = scmp.eq.s32.totalorder %s16, 3
    %p67 = por %p65, %p66
    %p68 = scmp.ne.s32.totalorder %s59, %s60
    %p69 = scmp.eq.s32.totalorder %s16, 0
    %p70 = por %p68, %p69
    %p71 = scmp.ne.s32.totalorder %s59, %s60
    %p72 = scmp.eq.s32.totalorder %s17, 3
    %p73 = por %p71, %p72
    %p75 = scmp.ne.s32.totalorder %s60, %s74
    %p76 = scmp.eq.s32.totalorder %s17, 0
    %p77 = por %p75, %p76
    %s79 = sadd.s32 %s78, 1
    %p82 = scmp.eq.s32.totalorder %s11, 3
    %p83 = scmp.ne.s32.totalorder %s78, %s80
    %p84 = scmp.eq.s32.totalorder %s11, 0
    %p85 = por %p83, %p84
    %p86 = scmp.ne.s32.totalorder %s78, %s80
    %p87 = scmp.eq.s32.totalorder %s16, 3
    %p88 = por %p86, %p87
    %p89 = scmp.ne.s32.totalorder %s80, %s81
    %p90 = scmp.eq.s32.totalorder %s16, 0
    %p91 = por %p89, %p90
    %p92 = scmp.ne.s32.totalorder %s80, %s81
    %p93 = scmp.eq.s32.totalorder %s17, 3
    %p94 = por %p92, %p93
    %p96 = scmp.ne.s32.totalorder %s81, %s95
    %p97 = scmp.eq.s32.totalorder %s17, 0
    %p98 = por %p96, %p97
    %s100 = sadd.s32 %s99, 1
    %p103 = scmp.eq.s32.totalorder %s11, 3
    %p104 = scmp.ne.s32.totalorder %s99, %s101
    %p105 = scmp.eq.s32.totalorder %s11, 0
    %p106 = por %p104, %p105
    %p107 = scmp.ne.s32.totalorder %s99, %s101
    %p108 = scmp.eq.s32.totalorder %s16, 3
    %p109 = por %p107, %p108
    %p110 = scmp.ne.s32.totalorder %s101, %s102
    %p111 = scmp.eq.s32.totalorder %s16, 0
    %p112 = por %p110, %p111
    %p113 = scmp.ne.s32.totalorder %s101, %s102
    %p114 = scmp.eq.s32.totalorder %s17, 3
    %p115 = por %p113, %p114
    %p117 = scmp.ne.s32.totalorder %s102, %s116
    %p118 = scmp.eq.s32.totalorder %s17, 0
    %p119 = por %p117, %p118
    %s121 = sadd.s32 %s120, 1
    %p124 = scmp.eq.s32.totalorder %s11, 3
    %p125 = scmp.ne.s32.totalorder %s120, %s122
    %p126 = scmp.eq.s32.totalorder %s11, 0
    %p127 = por %p125, %p126
    %p128 = scmp.ne.s32.totalorder %s120, %s122
    %p129 = scmp.eq.s32.totalorder %s16, 3
    %p130 = por %p128, %p129
    %p131 = scmp.ne.s32.totalorder %s122, %s123
    %p132 = scmp.eq.s32.totalorder %s16, 0
    %p133 = por %p131, %p132
    %p134 = scmp.ne.s32.totalorder %s122, %s123
    %p135 = scmp.eq.s32.totalorder %s17, 3
    %p136 = por %p134, %p135
    %p138 = scmp.ne.s32.totalorder %s123, %s137
    %p139 = scmp.eq.s32.totalorder %s17, 0
    %p140 = por %p138, %p139
    %s141 = ssub.s32 %s18, %s30
    %s142 = ssub.s32 %s19, %s26
    %s143 = sor.u32 %s141, %s142
    %p144 = scmp.eq.s32.totalorder %s143, 0
    %s146 = sadd.s32 %s145, 1
    %s147 = scalar_select %p144, %s145, %s146
    %p150 = pneg %p144
    %p151 = scmp.eq.s32.totalorder %s11, 3
    %p152 = por %p150, %p151
    %p153 = scmp.ne.s32.totalorder %s145, %s148
    %p154 = scmp.eq.s32.totalorder %s11, 0
    %p155 = por %p153, %p154
    %p156 = scmp.ne.s32.totalorder %s145, %s148
    %p157 = scmp.eq.s32.totalorder %s16, 3
    %p158 = por %p156, %p157
    %p159 = scmp.ne.s32.totalorder %s148, %s149
    %p160 = scmp.eq.s32.totalorder %s16, 0
    %p161 = por %p159, %p160
    %p162 = scmp.ne.s32.totalorder %s148, %s149
    %p163 = scmp.eq.s32.totalorder %s17, 3
    %p164 = por %p162, %p163
    %p166 = scmp.ne.s32.totalorder %s149, %s165
    %p167 = scmp.eq.s32.totalorder %s17, 0
    %p168 = por %p166, %p167
    %p169 = scmp.le.s32.totalorder 1, %s11
    %p170 = scmp.lt.s32.totalorder %s11, 5
    %p171 = pnand %p169, %p170
    %p172 = pneg %p171
    // Predicated region
    $region9: #{bisenet_output.1} parent=5 // pred_check
      _
    $region10: #{bisenet_output.1} parent=5 // pred_check_branch
      %174 = sbr.rel (%p171) target = $region12
    $region11: #{bisenet_output.1} parent=5 // pred_region
      %s175 = ssub.s32 %s11, 1
      // Predicated region
      $region13: #{bisenet_output.1} parent=11 // pred_check
        %p176 = pneg %p70
      $region14: #{bisenet_output.1} parent=11 // pred_check_branch
        %178 = sbr.rel (%p176) target = $region16
      $region15: #{bisenet_output.1} parent=11 // pred_region
        _
      $region16: #{bisenet_output.1} parent=11 // pred_fallthru
        _
      // Predicated region
      $region17: #{bisenet_output.1} parent=11 // pred_check
        %p179 = pneg %p91
      $region18: #{bisenet_output.1} parent=11 // pred_check_branch
        %181 = sbr.rel (%p179) target = $region20
      $region19: #{bisenet_output.1} parent=11 // pred_region
        _
      $region20: #{bisenet_output.1} parent=11 // pred_fallthru
        _
      // Predicated region
      $region21: #{bisenet_output.1} parent=11 // pred_check
        %p182 = pneg %p112
      $region22: #{bisenet_output.1} parent=11 // pred_check_branch
        %184 = sbr.rel (%p182) target = $region24
      $region23: #{bisenet_output.1} parent=11 // pred_region
        _
      $region24: #{bisenet_output.1} parent=11 // pred_fallthru
        _
      // Predicated region
      $region25: #{bisenet_output.1} parent=11 // pred_check
        %p185 = pneg %p133
      $region26: #{bisenet_output.1} parent=11 // pred_check_branch
        %187 = sbr.rel (%p185) target = $region28
      $region27: #{bisenet_output.1} parent=11 // pred_region
        _
      $region28: #{bisenet_output.1} parent=11 // pred_fallthru
        _
    $region12: #{bisenet_output.1} parent=5 // pred_fallthru
      _
    %p188 = scmp.lt.s32.totalorder %s11, 4
    // Predicated region
    $region29: #{bisenet_output.1} parent=5 // pred_check
      %p189 = pneg %p188
    $region30: #{bisenet_output.1} parent=5 // pred_check_branch
      %191 = sbr.rel (%p189) target = $region32
    $region31: #{bisenet_output.1} parent=5 // pred_region
      // Predicated region
      $region33: #{bisenet_output.1} parent=31 // pred_check
        %p192 = pneg %p43
      $region34: #{bisenet_output.1} parent=31 // pred_check_branch
        %194 = sbr.rel (%p192) target = $region36
      $region35: #{bisenet_output.1} parent=31 // pred_region
        %p195 = scmp.lt.s32.totalorder %s18, 1
        %s196 = scalar_select %p195, %s18, 1
        %s197 = smul.addr %s196, 54
        %s198 = smul.addr %s197, 4
        %s199 = scalar_lea.vmem %s0, %s198
      $region36: #{bisenet_output.1} parent=31 // pred_fallthru
        _
    $region32: #{bisenet_output.1} parent=5 // pred_fallthru
      _
    %p200 = scmp.le.s32.totalorder 1, %s11
    %p201 = scmp.lt.s32.totalorder %s11, 5
    %p202 = pnand %p200, %p201
    %p203 = pneg %p202
    // Predicated region
    $region37: #{bisenet_output.1} parent=5 // pred_check
      _
    $region38: #{bisenet_output.1} parent=5 // pred_check_branch
      %205 = sbr.rel (%p202) target = $region40
    $region39: #{bisenet_output.1} parent=5 // pred_region
      %s206 = ssub.s32 %s11, 1
      %p207 = scmp.lt.s32.totalorder %s20, 1
      %s208 = scalar_select %p207, %s20, 1
      %s209 = smul.addr %s208, 54
      %s210 = smul.addr %s209, 4
      %s211 = scalar_lea.vmem %s0, %s210
      %p212 = pneg %p49
      %p213 = pneg %p46
      %p214 = pneg %p70
      %p215 = pneg %p67
      %p216 = pneg %p91
      %p217 = pneg %p88
      %p218 = pneg %p112
      %p219 = pneg %p109
      %p220 = pneg %p133
      %p221 = pneg %p130
      %p222 = pneg %p161
      %p223 = pneg %p158
      %s224 = smul.u32 8, %s21
      %p225 = scmp.lt.s32.totalorder %s20, 1
      %s226 = scalar_select %p225, %s20, 1
      %p227 = scmp.lt.s32.totalorder %s224, 15
      %s228 = scalar_select %p227, %s224, 15
      %s229 = smul.addr %s228, 2
      %s230 = smul.addr %s226, 32
      %s231 = sadd.s32 %s229, %s230
      %s232 = smul.addr %s231, 8
      %s233 = scalar_lea.vmem %s5, %s232
      %p234 = scmp.lt.s32.totalorder %s20, 1
      %s235 = scalar_select %p234, %s20, 1
      %s236 = smul.addr %s235, 54
      %s237 = smul.addr %s236, 4
      %s238 = scalar_lea.vmem %s0, %s237
      %s239 = smul.u32 8, %s21
      %p240 = scmp.lt.s32.totalorder %s20, 1
      %s241 = scalar_select %p240, %s20, 1
      %p242 = scmp.lt.s32.totalorder %s239, 15
      %s243 = scalar_select %p242, %s239, 15
      %s244 = smul.addr %s243, 2
      %s245 = smul.addr %s241, 32
      %s246 = sadd.s32 %s244, %s245
      %s247 = smul.addr %s246, 8
      %s248 = scalar_lea.vmem %s5, %s247
      %s249 = smul.u32 8, %s21
      %s251 = smul.u32 %s21, 8
      %s252 = smul.u32 %s251, 3
      %s253 = smul.addr %s252, 4
      %s254 = scalar_lea.vmem %s238, %s253
      %v255 = vld [vmem:[%s254] sm:$0xf]
      %v256 = vld [vmem:[%s254 + $0x4] sm:$0xf]
      %v257 = vld [vmem:[%s254 + $0x8] sm:$0x1]
      %v258 = vld [vmem:[%s254 + $0xc] sm:$0xf]
      %v259 = vld [vmem:[%s254 + $0x10] sm:$0xf]
      %v260 = vld [vmem:[%s254 + $0x14] sm:$0x1]
      %v261 = vld [vmem:[%s254 + $0x18] sm:$0xf]
      %v262 = vld [vmem:[%s254 + $0x1c] sm:$0xf]
      %v263 = vld [vmem:[%s254 + $0x20] sm:$0x1]
      %v264 = vld [vmem:[%s254 + $0x24] sm:$0xf]
      %v265 = vld [vmem:[%s254 + $0x28] sm:$0xf]
      %v266 = vld [vmem:[%s254 + $0x2c] sm:$0x1]
      %v267 = vld [vmem:[%s254 + $0x30] sm:$0xf]
      %v268 = vld [vmem:[%s254 + $0x34] sm:$0xf]
      %v269 = vld [vmem:[%s254 + $0x38] sm:$0x1]
      %v270 = vld [vmem:[%s254 + $0x3c] sm:$0xf]
      %v271 = vld [vmem:[%s254 + $0x40] sm:$0xf]
      %v272 = vld [vmem:[%s254 + $0x44] sm:$0x1]
      %v273 = vld [vmem:[%s254 + $0x48] sm:$0xf]
      %v274 = vld [vmem:[%s254 + $0x4c] sm:$0xf]
      %v275 = vld [vmem:[%s254 + $0x50] sm:$0x1]
      %v276 = vld [vmem:[%s254 + $0x54] sm:$0xf]
      %v277 = vld [vmem:[%s254 + $0x58] sm:$0xf]
      %v278 = vld [vmem:[%s254 + $0x5c] sm:$0x1]
      %v279 = vunpack.c.l.bf16 %v255
      %v280 = vunpack.c.l.bf16 %v256
      %v281 = vunpack.c.l.bf16 %v257
      %v282 = vunpack.c.l.bf16 %v258
      %v283 = vunpack.c.l.bf16 %v259
      %v284 = vunpack.c.l.bf16 %v260
      %v285 = vunpack.c.l.bf16 %v261
      %v286 = vunpack.c.l.bf16 %v262
      %v287 = vunpack.c.l.bf16 %v263
      %v288 = vunpack.c.l.bf16 %v264
      %v289 = vunpack.c.l.bf16 %v265
      %v290 = vunpack.c.l.bf16 %v266
      %v291 = vunpack.c.l.bf16 %v267
      %v292 = vunpack.c.l.bf16 %v268
      %v293 = vunpack.c.l.bf16 %v269
      %v294 = vunpack.c.l.bf16 %v270
      %v295 = vunpack.c.l.bf16 %v271
      %v296 = vunpack.c.l.bf16 %v272
      %v297 = vunpack.c.l.bf16 %v273
      %v298 = vunpack.c.l.bf16 %v274
      %v299 = vunpack.c.l.bf16 %v275
      %v300 = vunpack.c.l.bf16 %v276
      %v301 = vunpack.c.l.bf16 %v277
      %v302 = vunpack.c.l.bf16 %v278
      %vm327 = vcmask 1046528
      %v328 = vrot.slane %v279, 1
      %v329 = vrot.slane %v280, 1
      %v330 = vsel %vm327, %v328, %v329
      %v331 = vrot.slane %v281, 1
      %v332 = vsel %vm327, %v329, %v331
      %v333 = vrot.slane %v282, 1
      %v334 = vrot.slane %v283, 1
      %v335 = vsel %vm327, %v333, %v334
      %v336 = vrot.slane %v284, 1
      %v337 = vsel %vm327, %v334, %v336
      %v338 = vrot.slane %v285, 1
      %v339 = vrot.slane %v286, 1
      %v340 = vsel %vm327, %v338, %v339
      %v341 = vrot.slane %v287, 1
      %v342 = vsel %vm327, %v339, %v341
      %v343 = vrot.slane %v288, 1
      %v344 = vrot.slane %v289, 1
      %v345 = vsel %vm327, %v343, %v344
      %v346 = vrot.slane %v290, 1
      %v347 = vsel %vm327, %v344, %v346
      %v348 = vrot.slane %v291, 1
      %v349 = vrot.slane %v292, 1
      %v350 = vsel %vm327, %v348, %v349
      %v351 = vrot.slane %v293, 1
      %v352 = vsel %vm327, %v349, %v351
      %v353 = vrot.slane %v294, 1
      %v354 = vrot.slane %v295, 1
      %v355 = vsel %vm327, %v353, %v354
      %v356 = vrot.slane %v296, 1
      %v357 = vsel %vm327, %v354, %v356
      %v358 = vrot.slane %v297, 1
      %v359 = vrot.slane %v298, 1
      %v360 = vsel %vm327, %v358, %v359
      %v361 = vrot.slane %v299, 1
      %v362 = vsel %vm327, %v359, %v361
      %v363 = vrot.slane %v300, 1
      %v364 = vrot.slane %v301, 1
      %v365 = vsel %vm327, %v363, %v364
      %v366 = vrot.slane %v302, 1
      %v367 = vsel %vm327, %v364, %v366
      %vm368 = vcmask 1045504
      %v369 = vrot.slane %v279, 2
      %v370 = vrot.slane %v280, 2
      %v371 = vsel %vm368, %v369, %v370
      %v372 = vrot.slane %v281, 2
      %v373 = vsel %vm368, %v370, %v372
      %v374 = vrot.slane %v282, 2
      %v375 = vrot.slane %v283, 2
      %v376 = vsel %vm368, %v374, %v375
      %v377 = vrot.slane %v284, 2
      %v378 = vsel %vm368, %v375, %v377
      %v379 = vrot.slane %v285, 2
      %v380 = vrot.slane %v286, 2
      %v381 = vsel %vm368, %v379, %v380
      %v382 = vrot.slane %v287, 2
      %v383 = vsel %vm368, %v380, %v382
      %v384 = vrot.slane %v288, 2
      %v385 = vrot.slane %v289, 2
      %v386 = vsel %vm368, %v384, %v385
      %v387 = vrot.slane %v290, 2
      %v388 = vsel %vm368, %v385, %v387
      %v389 = vrot.slane %v291, 2
      %v390 = vrot.slane %v292, 2
      %v391 = vsel %vm368, %v389, %v390
      %v392 = vrot.slane %v293, 2
      %v393 = vsel %vm368, %v390, %v392
      %v394 = vrot.slane %v294, 2
      %v395 = vrot.slane %v295, 2
      %v396 = vsel %vm368, %v394, %v395
      %v397 = vrot.slane %v296, 2
      %v398 = vsel %vm368, %v395, %v397
      %v399 = vrot.slane %v297, 2
      %v400 = vrot.slane %v298, 2
      %v401 = vsel %vm368, %v399, %v400
      %v402 = vrot.slane %v299, 2
      %v403 = vsel %vm368, %v400, %v402
      %v404 = vrot.slane %v300, 2
      %v405 = vrot.slane %v301, 2
      %v406 = vsel %vm368, %v404, %v405
      %v407 = vrot.slane %v302, 2
      %v408 = vsel %vm368, %v405, %v407
      %s409 = sadd.s32 %s251, 1
      %s410 = smul.u32 %s409, 3
      %s411 = smul.addr %s410, 4
      %s412 = scalar_lea.vmem %s238, %s411
      %v413 = vld [vmem:[%s412] sm:$0xf]
      %v414 = vld [vmem:[%s412 + $0x4] sm:$0xf]
      %v415 = vld [vmem:[%s412 + $0x8] sm:$0x1]
      %v416 = vld [vmem:[%s412 + $0xc] sm:$0xf]
      %v417 = vld [vmem:[%s412 + $0x10] sm:$0xf]
      %v418 = vld [vmem:[%s412 + $0x14] sm:$0x1]
      %v419 = vld [vmem:[%s412 + $0x18] sm:$0xf]
      %v420 = vld [vmem:[%s412 + $0x1c] sm:$0xf]
      %v421 = vld [vmem:[%s412 + $0x20] sm:$0x1]
      %v422 = vld [vmem:[%s412 + $0x24] sm:$0xf]
      %v423 = vld [vmem:[%s412 + $0x28] sm:$0xf]
      %v424 = vld [vmem:[%s412 + $0x2c] sm:$0x1]
      %v425 = vld [vmem:[%s412 + $0x30] sm:$0xf]
      %v426 = vld [vmem:[%s412 + $0x34] sm:$0xf]
      %v427 = vld [vmem:[%s412 + $0x38] sm:$0x1]
      %v428 = vld [vmem:[%s412 + $0x3c] sm:$0xf]
      %v429 = vld [vmem:[%s412 + $0x40] sm:$0xf]
      %v430 = vld [vmem:[%s412 + $0x44] sm:$0x1]
      %v431 = vld [vmem:[%s412 + $0x48] sm:$0xf]
      %v432 = vld [vmem:[%s412 + $0x4c] sm:$0xf]
      %v433 = vld [vmem:[%s412 + $0x50] sm:$0x1]
      %v434 = vld [vmem:[%s412 + $0x54] sm:$0xf]
      %v435 = vld [vmem:[%s412 + $0x58] sm:$0xf]
      %v436 = vld [vmem:[%s412 + $0x5c] sm:$0x1]
      %v437 = vunpack.c.l.bf16 %v413
      %v438 = vunpack.c.l.bf16 %v414
      %v439 = vunpack.c.l.bf16 %v415
      %v440 = vunpack.c.l.bf16 %v416
      %v441 = vunpack.c.l.bf16 %v417
      %v442 = vunpack.c.l.bf16 %v418
      %v443 = vunpack.c.l.bf16 %v419
      %v444 = vunpack.c.l.bf16 %v420
      %v445 = vunpack.c.l.bf16 %v421
      %v446 = vunpack.c.l.bf16 %v422
      %v447 = vunpack.c.l.bf16 %v423
      %v448 = vunpack.c.l.bf16 %v424
      %v449 = vunpack.c.l.bf16 %v425
      %v450 = vunpack.c.l.bf16 %v426
      %v451 = vunpack.c.l.bf16 %v427
      %v452 = vunpack.c.l.bf16 %v428
      %v453 = vunpack.c.l.bf16 %v429
      %v454 = vunpack.c.l.bf16 %v430
      %v455 = vunpack.c.l.bf16 %v431
      %v456 = vunpack.c.l.bf16 %v432
      %v457 = vunpack.c.l.bf16 %v433
      %v458 = vunpack.c.l.bf16 %v434
      %v459 = vunpack.c.l.bf16 %v435
      %v460 = vunpack.c.l.bf16 %v436
      %v485 = vrot.slane %v437, 1
      %v486 = vrot.slane %v438, 1
      %v487 = vsel %vm327, %v485, %v486
      %v488 = vrot.slane %v439, 1
      %v489 = vsel %vm327, %v486, %v488
      %v490 = vrot.slane %v440, 1
      %v491 = vrot.slane %v441, 1
      %v492 = vsel %vm327, %v490, %v491
      %v493 = vrot.slane %v442, 1
      %v494 = vsel %vm327, %v491, %v493
      %v495 = vrot.slane %v443, 1
      %v496 = vrot.slane %v444, 1
      %v497 = vsel %vm327, %v495, %v496
      %v498 = vrot.slane %v445, 1
      %v499 = vsel %vm327, %v496, %v498
      %v500 = vrot.slane %v446, 1
      %v501 = vrot.slane %v447, 1
      %v502 = vsel %vm327, %v500, %v501
      %v503 = vrot.slane %v448, 1
      %v504 = vsel %vm327, %v501, %v503
      %v505 = vrot.slane %v449, 1
      %v506 = vrot.slane %v450, 1
      %v507 = vsel %vm327, %v505, %v506
      %v508 = vrot.slane %v451, 1
      %v509 = vsel %vm327, %v506, %v508
      %v510 = vrot.slane %v452, 1
      %v511 = vrot.slane %v453, 1
      %v512 = vsel %vm327, %v510, %v511
      %v513 = vrot.slane %v454, 1
      %v514 = vsel %vm327, %v511, %v513
      %v515 = vrot.slane %v455, 1
      %v516 = vrot.slane %v456, 1
      %v517 = vsel %vm327, %v515, %v516
      %v518 = vrot.slane %v457, 1
      %v519 = vsel %vm327, %v516, %v518
      %v520 = vrot.slane %v458, 1
      %v521 = vrot.slane %v459, 1
      %v522 = vsel %vm327, %v520, %v521
      %v523 = vrot.slane %v460, 1
      %v524 = vsel %vm327, %v521, %v523
      %v525 = vrot.slane %v437, 2
      %v526 = vrot.slane %v438, 2
      %v527 = vsel %vm368, %v525, %v526
      %v528 = vrot.slane %v439, 2
      %v529 = vsel %vm368, %v526, %v528
      %v530 = vrot.slane %v440, 2
      %v531 = vrot.slane %v441, 2
      %v532 = vsel %vm368, %v530, %v531
      %v533 = vrot.slane %v442, 2
      %v534 = vsel %vm368, %v531, %v533
      %v535 = vrot.slane %v443, 2
      %v536 = vrot.slane %v444, 2
      %v537 = vsel %vm368, %v535, %v536
      %v538 = vrot.slane %v445, 2
      %v539 = vsel %vm368, %v536, %v538
      %v540 = vrot.slane %v446, 2
      %v541 = vrot.slane %v447, 2
      %v542 = vsel %vm368, %v540, %v541
      %v543 = vrot.slane %v448, 2
      %v544 = vsel %vm368, %v541, %v543
      %v545 = vrot.slane %v449, 2
      %v546 = vrot.slane %v450, 2
      %v547 = vsel %vm368, %v545, %v546
      %v548 = vrot.slane %v451, 2
      %v549 = vsel %vm368, %v546, %v548
      %v550 = vrot.slane %v452, 2
      %v551 = vrot.slane %v453, 2
      %v552 = vsel %vm368, %v550, %v551
      %v553 = vrot.slane %v454, 2
      %v554 = vsel %vm368, %v551, %v553
      %v555 = vrot.slane %v455, 2
      %v556 = vrot.slane %v456, 2
      %v557 = vsel %vm368, %v555, %v556
      %v558 = vrot.slane %v457, 2
      %v559 = vsel %vm368, %v556, %v558
      %v560 = vrot.slane %v458, 2
      %v561 = vrot.slane %v459, 2
      %v562 = vsel %vm368, %v560, %v561
      %v563 = vrot.slane %v460, 2
      %v564 = vsel %vm368, %v561, %v563
      %s565 = sadd.s32 %s251, 2
      %s566 = smul.u32 %s565, 3
      %s567 = smul.addr %s566, 4
      %s568 = scalar_lea.vmem %s238, %s567
      %v569 = vld [vmem:[%s568] sm:$0xf]
      %v570 = vld [vmem:[%s568 + $0x4] sm:$0xf]
      %v571 = vld [vmem:[%s568 + $0x8] sm:$0x1]
      %v572 = vld [vmem:[%s568 + $0xc] sm:$0xf]
      %v573 = vld [vmem:[%s568 + $0x10] sm:$0xf]
      %v574 = vld [vmem:[%s568 + $0x14] sm:$0x1]
      %v575 = vld [vmem:[%s568 + $0x18] sm:$0xf]
      %v576 = vld [vmem:[%s568 + $0x1c] sm:$0xf]
      %v577 = vld [vmem:[%s568 + $0x20] sm:$0x1]
      %v578 = vld [vmem:[%s568 + $0x24] sm:$0xf]
      %v579 = vld [vmem:[%s568 + $0x28] sm:$0xf]
      %v580 = vld [vmem:[%s568 + $0x2c] sm:$0x1]
      %v581 = vld [vmem:[%s568 + $0x30] sm:$0xf]
      %v582 = vld [vmem:[%s568 + $0x34] sm:$0xf]
      %v583 = vld [vmem:[%s568 + $0x38] sm:$0x1]
      %v584 = vld [vmem:[%s568 + $0x3c] sm:$0xf]
      %v585 = vld [vmem:[%s568 + $0x40] sm:$0xf]
      %v586 = vld [vmem:[%s568 + $0x44] sm:$0x1]
      %v587 = vld [vmem:[%s568 + $0x48] sm:$0xf]
      %v588 = vld [vmem:[%s568 + $0x4c] sm:$0xf]
      %v589 = vld [vmem:[%s568 + $0x50] sm:$0x1]
      %v590 = vld [vmem:[%s568 + $0x54] sm:$0xf]
      %v591 = vld [vmem:[%s568 + $0x58] sm:$0xf]
      %v592 = vld [vmem:[%s568 + $0x5c] sm:$0x1]
      %v593 = vunpack.c.l.bf16 %v569
      %v594 = vunpack.c.l.bf16 %v570
      %v595 = vunpack.c.l.bf16 %v571
      %v596 = vunpack.c.l.bf16 %v572
      %v597 = vunpack.c.l.bf16 %v573
      %v598 = vunpack.c.l.bf16 %v574
      %v599 = vunpack.c.l.bf16 %v575
      %v600 = vunpack.c.l.bf16 %v576
      %v601 = vunpack.c.l.bf16 %v577
      %v602 = vunpack.c.l.bf16 %v578
      %v603 = vunpack.c.l.bf16 %v579
      %v604 = vunpack.c.l.bf16 %v580
      %v605 = vunpack.c.l.bf16 %v581
      %v606 = vunpack.c.l.bf16 %v582
      %v607 = vunpack.c.l.bf16 %v583
      %v608 = vunpack.c.l.bf16 %v584
      %v609 = vunpack.c.l.bf16 %v585
      %v610 = vunpack.c.l.bf16 %v586
      %v611 = vunpack.c.l.bf16 %v587
      %v612 = vunpack.c.l.bf16 %v588
      %v613 = vunpack.c.l.bf16 %v589
      %v614 = vunpack.c.l.bf16 %v590
      %v615 = vunpack.c.l.bf16 %v591
      %v616 = vunpack.c.l.bf16 %v592
      %v641 = vrot.slane %v593, 1
      %v642 = vrot.slane %v594, 1
      %v643 = vsel %vm327, %v641, %v642
      %v644 = vrot.slane %v595, 1
      %v645 = vsel %vm327, %v642, %v644
      %v646 = vrot.slane %v596, 1
      %v647 = vrot.slane %v597, 1
      %v648 = vsel %vm327, %v646, %v647
      %v649 = vrot.slane %v598, 1
      %v650 = vsel %vm327, %v647, %v649
      %v651 = vrot.slane %v599, 1
      %v652 = vrot.slane %v600, 1
      %v653 = vsel %vm327, %v651, %v652
      %v654 = vrot.slane %v601, 1
      %v655 = vsel %vm327, %v652, %v654
      %v656 = vrot.slane %v602, 1
      %v657 = vrot.slane %v603, 1
      %v658 = vsel %vm327, %v656, %v657
      %v659 = vrot.slane %v604, 1
      %v660 = vsel %vm327, %v657, %v659
      %v661 = vrot.slane %v605, 1
      %v662 = vrot.slane %v606, 1
      %v663 = vsel %vm327, %v661, %v662
      %v664 = vrot.slane %v607, 1
      %v665 = vsel %vm327, %v662, %v664
      %v666 = vrot.slane %v608, 1
      %v667 = vrot.slane %v609, 1
      %v668 = vsel %vm327, %v666, %v667
      %v669 = vrot.slane %v610, 1
      %v670 = vsel %vm327, %v667, %v669
      %v671 = vrot.slane %v611, 1
      %v672 = vrot.slane %v612, 1
      %v673 = vsel %vm327, %v671, %v672
      %v674 = vrot.slane %v613, 1
      %v675 = vsel %vm327, %v672, %v674
      %v676 = vrot.slane %v614, 1
      %v677 = vrot.slane %v615, 1
      %v678 = vsel %vm327, %v676, %v677
      %v679 = vrot.slane %v616, 1
      %v680 = vsel %vm327, %v677, %v679
      %v681 = vrot.slane %v593, 2
      %v682 = vrot.slane %v594, 2
      %v683 = vsel %vm368, %v681, %v682
      %v684 = vrot.slane %v595, 2
      %v685 = vsel %vm368, %v682, %v684
      %v686 = vrot.slane %v596, 2
      %v687 = vrot.slane %v597, 2
      %v688 = vsel %vm368, %v686, %v687
      %v689 = vrot.slane %v598, 2
      %v690 = vsel %vm368, %v687, %v689
      %v691 = vrot.slane %v599, 2
      %v692 = vrot.slane %v600, 2
      %v693 = vsel %vm368, %v691, %v692
      %v694 = vrot.slane %v601, 2
      %v695 = vsel %vm368, %v692, %v694
      %v696 = vrot.slane %v602, 2
      %v697 = vrot.slane %v603, 2
      %v698 = vsel %vm368, %v696, %v697
      %v699 = vrot.slane %v604, 2
      %v700 = vsel %vm368, %v697, %v699
      %v701 = vrot.slane %v605, 2
      %v702 = vrot.slane %v606, 2
      %v703 = vsel %vm368, %v701, %v702
      %v704 = vrot.slane %v607, 2
      %v705 = vsel %vm368, %v702, %v704
      %v706 = vrot.slane %v608, 2
      %v707 = vrot.slane %v609, 2
      %v708 = vsel %vm368, %v706, %v707
      %v709 = vrot.slane %v610, 2
      %v710 = vsel %vm368, %v707, %v709
      %v711 = vrot.slane %v611, 2
      %v712 = vrot.slane %v612, 2
      %v713 = vsel %vm368, %v711, %v712
      %v714 = vrot.slane %v613, 2
      %v715 = vsel %vm368, %v712, %v714
      %v716 = vrot.slane %v614, 2
      %v717 = vrot.slane %v615, 2
      %v718 = vsel %vm368, %v716, %v717
      %v719 = vrot.slane %v616, 2
      %v720 = vsel %vm368, %v717, %v719
      %721 = vrot.lane.b32.xlu0 %v330, 4
      %v722 = vpop.permute.xlu0 %721
      %723 = vrot.lane.b32.xlu0 %v332, 4
      %v724 = vpop.permute.xlu0 %723
      %725 = vrot.lane.b32.xlu0 %v335, 4
      %v726 = vpop.permute.xlu0 %725
      %727 = vrot.lane.b32.xlu0 %v337, 4
      %v728 = vpop.permute.xlu0 %727
      %729 = vrot.lane.b32.xlu0 %v340, 4
      %v730 = vpop.permute.xlu0 %729
      %731 = vrot.lane.b32.xlu0 %v342, 4
      %v732 = vpop.permute.xlu0 %731
      %733 = vrot.lane.b32.xlu0 %v345, 4
      %v734 = vpop.permute.xlu0 %733
      %735 = vrot.lane.b32.xlu0 %v347, 4
      %v736 = vpop.permute.xlu0 %735
      %737 = vrot.lane.b32.xlu0 %v350, 4
      %v738 = vpop.permute.xlu0 %737
      %739 = vrot.lane.b32.xlu0 %v352, 4
      %v740 = vpop.permute.xlu0 %739
      %741 = vrot.lane.b32.xlu0 %v355, 4
      %v742 = vpop.permute.xlu0 %741
      %743 = vrot.lane.b32.xlu0 %v357, 4
      %v744 = vpop.permute.xlu0 %743
      %745 = vrot.lane.b32.xlu0 %v360, 4
      %v746 = vpop.permute.xlu0 %745
      %747 = vrot.lane.b32.xlu0 %v362, 4
      %v748 = vpop.permute.xlu0 %747
      %749 = vrot.lane.b32.xlu0 %v365, 4
      %v750 = vpop.permute.xlu0 %749
      %751 = vrot.lane.b32.xlu0 %v367, 4
      %v752 = vpop.permute.xlu0 %751
      %769 = vrot.lane.b32.xlu0 %v371, 8
      %v770 = vpop.permute.xlu0 %769
      %771 = vrot.lane.b32.xlu0 %v373, 8
      %v772 = vpop.permute.xlu0 %771
      %773 = vrot.lane.b32.xlu0 %v376, 8
      %v774 = vpop.permute.xlu0 %773
      %775 = vrot.lane.b32.xlu0 %v378, 8
      %v776 = vpop.permute.xlu0 %775
      %777 = vrot.lane.b32.xlu0 %v381, 8
      %v778 = vpop.permute.xlu0 %777
      %779 = vrot.lane.b32.xlu0 %v383, 8
      %v780 = vpop.permute.xlu0 %779
      %781 = vrot.lane.b32.xlu0 %v386, 8
      %v782 = vpop.permute.xlu0 %781
      %783 = vrot.lane.b32.xlu0 %v388, 8
      %v784 = vpop.permute.xlu0 %783
      %785 = vrot.lane.b32.xlu0 %v391, 8
      %v786 = vpop.permute.xlu0 %785
      %787 = vrot.lane.b32.xlu0 %v393, 8
      %v788 = vpop.permute.xlu0 %787
      %789 = vrot.lane.b32.xlu0 %v396, 8
      %v790 = vpop.permute.xlu0 %789
      %791 = vrot.lane.b32.xlu0 %v398, 8
      %v792 = vpop.permute.xlu0 %791
      %793 = vrot.lane.b32.xlu0 %v401, 8
      %v794 = vpop.permute.xlu0 %793
      %795 = vrot.lane.b32.xlu0 %v403, 8
      %v796 = vpop.permute.xlu0 %795
      %797 = vrot.lane.b32.xlu0 %v406, 8
      %v798 = vpop.permute.xlu0 %797
      %799 = vrot.lane.b32.xlu0 %v408, 8
      %v800 = vpop.permute.xlu0 %799
      %817 = vrot.lane.b32.xlu0 %v437, 12
      %v818 = vpop.permute.xlu0 %817
      %819 = vrot.lane.b32.xlu0 %v438, 12
      %v820 = vpop.permute.xlu0 %819
      %821 = vrot.lane.b32.xlu0 %v440, 12
      %v822 = vpop.permute.xlu0 %821
      %823 = vrot.lane.b32.xlu0 %v441, 12
      %v824 = vpop.permute.xlu0 %823
      %825 = vrot.lane.b32.xlu0 %v443, 12
      %v826 = vpop.permute.xlu0 %825
      %827 = vrot.lane.b32.xlu0 %v444, 12
      %v828 = vpop.permute.xlu0 %827
      %829 = vrot.lane.b32.xlu0 %v446, 12
      %v830 = vpop.permute.xlu0 %829
      %831 = vrot.lane.b32.xlu0 %v447, 12
      %v832 = vpop.permute.xlu0 %831
      %833 = vrot.lane.b32.xlu0 %v449, 12
      %v834 = vpop.permute.xlu0 %833
      %835 = vrot.lane.b32.xlu0 %v450, 12
      %v836 = vpop.permute.xlu0 %835
      %837 = vrot.lane.b32.xlu0 %v452, 12
      %v838 = vpop.permute.xlu0 %837
      %839 = vrot.lane.b32.xlu0 %v453, 12
      %v840 = vpop.permute.xlu0 %839
      %841 = vrot.lane.b32.xlu0 %v455, 12
      %v842 = vpop.permute.xlu0 %841
      %843 = vrot.lane.b32.xlu0 %v456, 12
      %v844 = vpop.permute.xlu0 %843
      %845 = vrot.lane.b32.xlu0 %v458, 12
      %v846 = vpop.permute.xlu0 %845
      %847 = vrot.lane.b32.xlu0 %v459, 12
      %v848 = vpop.permute.xlu0 %847
      %865 = vrot.lane.b32.xlu0 %v487, 16
      %v866 = vpop.permute.xlu0 %865
      %867 = vrot.lane.b32.xlu0 %v489, 16
      %v868 = vpop.permute.xlu0 %867
      %869 = vrot.lane.b32.xlu0 %v492, 16
      %v870 = vpop.permute.xlu0 %869
      %871 = vrot.lane.b32.xlu0 %v494, 16
      %v872 = vpop.permute.xlu0 %871
      %873 = vrot.lane.b32.xlu0 %v497, 16
      %v874 = vpop.permute.xlu0 %873
      %875 = vrot.lane.b32.xlu0 %v499, 16
      %v876 = vpop.permute.xlu0 %875
      %877 = vrot.lane.b32.xlu0 %v502, 16
      %v878 = vpop.permute.xlu0 %877
      %879 = vrot.lane.b32.xlu0 %v504, 16
      %v880 = vpop.permute.xlu0 %879
      %881 = vrot.lane.b32.xlu0 %v507, 16
      %v882 = vpop.permute.xlu0 %881
      %883 = vrot.lane.b32.xlu0 %v509, 16
      %v884 = vpop.permute.xlu0 %883
      %885 = vrot.lane.b32.xlu0 %v512, 16
      %v886 = vpop.permute.xlu0 %885
      %887 = vrot.lane.b32.xlu0 %v514, 16
      %v888 = vpop.permute.xlu0 %887
      %889 = vrot.lane.b32.xlu0 %v517, 16
      %v890 = vpop.permute.xlu0 %889
      %891 = vrot.lane.b32.xlu0 %v519, 16
      %v892 = vpop.permute.xlu0 %891
      %893 = vrot.lane.b32.xlu0 %v522, 16
      %v894 = vpop.permute.xlu0 %893
      %895 = vrot.lane.b32.xlu0 %v524, 16
      %v896 = vpop.permute.xlu0 %895
      %913 = vrot.lane.b32.xlu0 %v527, 20
      %v914 = vpop.permute.xlu0 %913
      %915 = vrot.lane.b32.xlu0 %v529, 20
      %v916 = vpop.permute.xlu0 %915
      %917 = vrot.lane.b32.xlu0 %v532, 20
      %v918 = vpop.permute.xlu0 %917
      %919 = vrot.lane.b32.xlu0 %v534, 20
      %v920 = vpop.permute.xlu0 %919
      %921 = vrot.lane.b32.xlu0 %v537, 20
      %v922 = vpop.permute.xlu0 %921
      %923 = vrot.lane.b32.xlu0 %v539, 20
      %v924 = vpop.permute.xlu0 %923
      %925 = vrot.lane.b32.xlu0 %v542, 20
      %v926 = vpop.permute.xlu0 %925
      %927 = vrot.lane.b32.xlu0 %v544, 20
      %v928 = vpop.permute.xlu0 %927
      %929 = vrot.lane.b32.xlu0 %v547, 20
      %v930 = vpop.permute.xlu0 %929
      %931 = vrot.lane.b32.xlu0 %v549, 20
      %v932 = vpop.permute.xlu0 %931
      %933 = vrot.lane.b32.xlu0 %v552, 20
      %v934 = vpop.permute.xlu0 %933
      %935 = vrot.lane.b32.xlu0 %v554, 20
      %v936 = vpop.permute.xlu0 %935
      %937 = vrot.lane.b32.xlu0 %v557, 20
      %v938 = vpop.permute.xlu0 %937
      %939 = vrot.lane.b32.xlu0 %v559, 20
      %v940 = vpop.permute.xlu0 %939
      %941 = vrot.lane.b32.xlu0 %v562, 20
      %v942 = vpop.permute.xlu0 %941
      %943 = vrot.lane.b32.xlu0 %v564, 20
      %v944 = vpop.permute.xlu0 %943
      %961 = vrot.lane.b32.xlu0 %v593, 24
      %v962 = vpop.permute.xlu0 %961
      %963 = vrot.lane.b32.xlu0 %v594, 24
      %v964 = vpop.permute.xlu0 %963
      %965 = vrot.lane.b32.xlu0 %v596, 24
      %v966 = vpop.permute.xlu0 %965
      %967 = vrot.lane.b32.xlu0 %v597, 24
      %v968 = vpop.permute.xlu0 %967
      %969 = vrot.lane.b32.xlu0 %v599, 24
      %v970 = vpop.permute.xlu0 %969
      %971 = vrot.lane.b32.xlu0 %v600, 24
      %v972 = vpop.permute.xlu0 %971
      %973 = vrot.lane.b32.xlu0 %v602, 24
      %v974 = vpop.permute.xlu0 %973
      %975 = vrot.lane.b32.xlu0 %v603, 24
      %v976 = vpop.permute.xlu0 %975
      %977 = vrot.lane.b32.xlu0 %v605, 24
      %v978 = vpop.permute.xlu0 %977
      %979 = vrot.lane.b32.xlu0 %v606, 24
      %v980 = vpop.permute.xlu0 %979
      %981 = vrot.lane.b32.xlu0 %v608, 24
      %v982 = vpop.permute.xlu0 %981
      %983 = vrot.lane.b32.xlu0 %v609, 24
      %v984 = vpop.permute.xlu0 %983
      %985 = vrot.lane.b32.xlu0 %v611, 24
      %v986 = vpop.permute.xlu0 %985
      %987 = vrot.lane.b32.xlu0 %v612, 24
      %v988 = vpop.permute.xlu0 %987
      %989 = vrot.lane.b32.xlu0 %v614, 24
      %v990 = vpop.permute.xlu0 %989
      %991 = vrot.lane.b32.xlu0 %v615, 24
      %v992 = vpop.permute.xlu0 %991
      %1009 = vrot.lane.b32.xlu0 %v643, 28
      %v1010 = vpop.permute.xlu0 %1009
      %1011 = vrot.lane.b32.xlu0 %v645, 28
      %v1012 = vpop.permute.xlu0 %1011
      %1013 = vrot.lane.b32.xlu0 %v648, 28
      %v1014 = vpop.permute.xlu0 %1013
      %1015 = vrot.lane.b32.xlu0 %v650, 28
      %v1016 = vpop.permute.xlu0 %1015
      %1017 = vrot.lane.b32.xlu0 %v653, 28
      %v1018 = vpop.permute.xlu0 %1017
      %1019 = vrot.lane.b32.xlu0 %v655, 28
      %v1020 = vpop.permute.xlu0 %1019
      %1021 = vrot.lane.b32.xlu0 %v658, 28
      %v1022 = vpop.permute.xlu0 %1021
      %1023 = vrot.lane.b32.xlu0 %v660, 28
      %v1024 = vpop.permute.xlu0 %1023
      %1025 = vrot.lane.b32.xlu0 %v663, 28
      %v1026 = vpop.permute.xlu0 %1025
      %1027 = vrot.lane.b32.xlu0 %v665, 28
      %v1028 = vpop.permute.xlu0 %1027
      %1029 = vrot.lane.b32.xlu0 %v668, 28
      %v1030 = vpop.permute.xlu0 %1029
      %1031 = vrot.lane.b32.xlu0 %v670, 28
      %v1032 = vpop.permute.xlu0 %1031
      %1033 = vrot.lane.b32.xlu0 %v673, 28
      %v1034 = vpop.permute.xlu0 %1033
      %1035 = vrot.lane.b32.xlu0 %v675, 28
      %v1036 = vpop.permute.xlu0 %1035
      %1037 = vrot.lane.b32.xlu0 %v678, 28
      %v1038 = vpop.permute.xlu0 %1037
      %1039 = vrot.lane.b32.xlu0 %v680, 28
      %v1040 = vpop.permute.xlu0 %1039
      %1057 = vrot.lane.b32.xlu0 %v683, 32
      %v1058 = vpop.permute.xlu0 %1057
      %1059 = vrot.lane.b32.xlu0 %v685, 32
      %v1060 = vpop.permute.xlu0 %1059
      %1061 = vrot.lane.b32.xlu0 %v688, 32
      %v1062 = vpop.permute.xlu0 %1061
      %1063 = vrot.lane.b32.xlu0 %v690, 32
      %v1064 = vpop.permute.xlu0 %1063
      %1065 = vrot.lane.b32.xlu0 %v693, 32
      %v1066 = vpop.permute.xlu0 %1065
      %1067 = vrot.lane.b32.xlu0 %v695, 32
      %v1068 = vpop.permute.xlu0 %1067
      %1069 = vrot.lane.b32.xlu0 %v698, 32
      %v1070 = vpop.permute.xlu0 %1069
      %1071 = vrot.lane.b32.xlu0 %v700, 32
      %v1072 = vpop.permute.xlu0 %1071
      %1073 = vrot.lane.b32.xlu0 %v703, 32
      %v1074 = vpop.permute.xlu0 %1073
      %1075 = vrot.lane.b32.xlu0 %v705, 32
      %v1076 = vpop.permute.xlu0 %1075
      %1077 = vrot.lane.b32.xlu0 %v708, 32
      %v1078 = vpop.permute.xlu0 %1077
      %1079 = vrot.lane.b32.xlu0 %v710, 32
      %v1080 = vpop.permute.xlu0 %1079
      %1081 = vrot.lane.b32.xlu0 %v713, 32
      %v1082 = vpop.permute.xlu0 %1081
      %1083 = vrot.lane.b32.xlu0 %v715, 32
      %v1084 = vpop.permute.xlu0 %1083
      %1085 = vrot.lane.b32.xlu0 %v718, 32
      %v1086 = vpop.permute.xlu0 %1085
      %1087 = vrot.lane.b32.xlu0 %v720, 32
      %v1088 = vpop.permute.xlu0 %1087
      %vm1105 = vcmask 31744
      %v1106 = vsel %vm1105, %v279, %v722
      %v1107 = vsel %vm1105, %v280, %v724
      %v1108 = vsel %vm1105, %v282, %v726
      %v1109 = vsel %vm1105, %v283, %v728
      %v1110 = vsel %vm1105, %v285, %v730
      %v1111 = vsel %vm1105, %v286, %v732
      %v1112 = vsel %vm1105, %v288, %v734
      %v1113 = vsel %vm1105, %v289, %v736
      %v1114 = vsel %vm1105, %v291, %v738
      %v1115 = vsel %vm1105, %v292, %v740
      %v1116 = vsel %vm1105, %v294, %v742
      %v1117 = vsel %vm1105, %v295, %v744
      %v1118 = vsel %vm1105, %v297, %v746
      %v1119 = vsel %vm1105, %v298, %v748
      %v1120 = vsel %vm1105, %v300, %v750
      %v1121 = vsel %vm1105, %v301, %v752
      %vm1122 = vcmask 64512
      %v1123 = vsel %vm1122, %v1106, %v770
      %v1124 = vsel %vm1122, %v1107, %v772
      %v1125 = vsel %vm1122, %v1108, %v774
      %v1126 = vsel %vm1122, %v1109, %v776
      %v1127 = vsel %vm1122, %v1110, %v778
      %v1128 = vsel %vm1122, %v1111, %v780
      %v1129 = vsel %vm1122, %v1112, %v782
      %v1130 = vsel %vm1122, %v1113, %v784
      %v1131 = vsel %vm1122, %v1114, %v786
      %v1132 = vsel %vm1122, %v1115, %v788
      %v1133 = vsel %vm1122, %v1116, %v790
      %v1134 = vsel %vm1122, %v1117, %v792
      %v1135 = vsel %vm1122, %v1118, %v794
      %v1136 = vsel %vm1122, %v1119, %v796
      %v1137 = vsel %vm1122, %v1120, %v798
      %v1138 = vsel %vm1122, %v1121, %v800
      %vm1139 = vcmask 97280
      %v1140 = vsel %vm1139, %v1123, %v818
      %v1141 = vsel %vm1139, %v1124, %v820
      %v1142 = vsel %vm1139, %v1125, %v822
      %v1143 = vsel %vm1139, %v1126, %v824
      %v1144 = vsel %vm1139, %v1127, %v826
      %v1145 = vsel %vm1139, %v1128, %v828
      %v1146 = vsel %vm1139, %v1129, %v830
      %v1147 = vsel %vm1139, %v1130, %v832
      %v1148 = vsel %vm1139, %v1131, %v834
      %v1149 = vsel %vm1139, %v1132, %v836
      %v1150 = vsel %vm1139, %v1133, %v838
      %v1151 = vsel %vm1139, %v1134, %v840
      %v1152 = vsel %vm1139, %v1135, %v842
      %v1153 = vsel %vm1139, %v1136, %v844
      %v1154 = vsel %vm1139, %v1137, %v846
      %v1155 = vsel %vm1139, %v1138, %v848
      %vm1156 = vcmask 130048
      %v1157 = vsel %vm1156, %v1140, %v866
      %v1158 = vsel %vm1156, %v1141, %v868
      %v1159 = vsel %vm1156, %v1142, %v870
      %v1160 = vsel %vm1156, %v1143, %v872
      %v1161 = vsel %vm1156, %v1144, %v874
      %v1162 = vsel %vm1156, %v1145, %v876
      %v1163 = vsel %vm1156, %v1146, %v878
      %v1164 = vsel %vm1156, %v1147, %v880
      %v1165 = vsel %vm1156, %v1148, %v882
      %v1166 = vsel %vm1156, %v1149, %v884
      %v1167 = vsel %vm1156, %v1150, %v886
      %v1168 = vsel %vm1156, %v1151, %v888
      %v1169 = vsel %vm1156, %v1152, %v890
      %v1170 = vsel %vm1156, %v1153, %v892
      %v1171 = vsel %vm1156, %v1154, %v894
      %v1172 = vsel %vm1156, %v1155, %v896
      %vm1173 = vcmask 162816
      %v1174 = vsel %vm1173, %v1157, %v914
      %v1175 = vsel %vm1173, %v1158, %v916
      %v1176 = vsel %vm1173, %v1159, %v918
      %v1177 = vsel %vm1173, %v1160, %v920
      %v1178 = vsel %vm1173, %v1161, %v922
      %v1179 = vsel %vm1173, %v1162, %v924
      %v1180 = vsel %vm1173, %v1163, %v926
      %v1181 = vsel %vm1173, %v1164, %v928
      %v1182 = vsel %vm1173, %v1165, %v930
      %v1183 = vsel %vm1173, %v1166, %v932
      %v1184 = vsel %vm1173, %v1167, %v934
      %v1185 = vsel %vm1173, %v1168, %v936
      %v1186 = vsel %vm1173, %v1169, %v938
      %v1187 = vsel %vm1173, %v1170, %v940
      %v1188 = vsel %vm1173, %v1171, %v942
      %v1189 = vsel %vm1173, %v1172, %v944
      %vm1190 = vcmask 195584
      %v1191 = vsel %vm1190, %v1174, %v962
      %v1192 = vsel %vm1190, %v1175, %v964
      %v1193 = vsel %vm1190, %v1176, %v966
      %v1194 = vsel %vm1190, %v1177, %v968
      %v1195 = vsel %vm1190, %v1178, %v970
      %v1196 = vsel %vm1190, %v1179, %v972
      %v1197 = vsel %vm1190, %v1180, %v974
      %v1198 = vsel %vm1190, %v1181, %v976
      %v1199 = vsel %vm1190, %v1182, %v978
      %v1200 = vsel %vm1190, %v1183, %v980
      %v1201 = vsel %vm1190, %v1184, %v982
      %v1202 = vsel %vm1190, %v1185, %v984
      %v1203 = vsel %vm1190, %v1186, %v986
      %v1204 = vsel %vm1190, %v1187, %v988
      %v1205 = vsel %vm1190, %v1188, %v990
      %v1206 = vsel %vm1190, %v1189, %v992
      %vm1207 = vcmask 228352
      %v1208 = vsel %vm1207, %v1191, %v1010
      %v1209 = vsel %vm1207, %v1192, %v1012
      %v1210 = vsel %vm1207, %v1193, %v1014
      %v1211 = vsel %vm1207, %v1194, %v1016
      %v1212 = vsel %vm1207, %v1195, %v1018
      %v1213 = vsel %vm1207, %v1196, %v1020
      %v1214 = vsel %vm1207, %v1197, %v1022
      %v1215 = vsel %vm1207, %v1198, %v1024
      %v1216 = vsel %vm1207, %v1199, %v1026
      %v1217 = vsel %vm1207, %v1200, %v1028
      %v1218 = vsel %vm1207, %v1201, %v1030
      %v1219 = vsel %vm1207, %v1202, %v1032
      %v1220 = vsel %vm1207, %v1203, %v1034
      %v1221 = vsel %vm1207, %v1204, %v1036
      %v1222 = vsel %vm1207, %v1205, %v1038
      %v1223 = vsel %vm1207, %v1206, %v1040
      %vm1224 = vcmask 261120
      %v1225 = vsel %vm1224, %v1208, %v1058
      %v1226 = vsel %vm1224, %v1209, %v1060
      %v1227 = vsel %vm1224, %v1210, %v1062
      %v1228 = vsel %vm1224, %v1211, %v1064
      %v1229 = vsel %vm1224, %v1212, %v1066
      %v1230 = vsel %vm1224, %v1213, %v1068
      %v1231 = vsel %vm1224, %v1214, %v1070
      %v1232 = vsel %vm1224, %v1215, %v1072
      %v1233 = vsel %vm1224, %v1216, %v1074
      %v1234 = vsel %vm1224, %v1217, %v1076
      %v1235 = vsel %vm1224, %v1218, %v1078
      %v1236 = vsel %vm1224, %v1219, %v1080
      %v1237 = vsel %vm1224, %v1220, %v1082
      %v1238 = vsel %vm1224, %v1221, %v1084
      %v1239 = vsel %vm1224, %v1222, %v1086
      %v1240 = vsel %vm1224, %v1223, %v1088
      %v1241 = vpack.c.bf16 %v1226, %v1225
      %v1242 = vpack.c.bf16 %v1228, %v1227
      %v1243 = vpack.c.bf16 %v1230, %v1229
      %v1244 = vpack.c.bf16 %v1232, %v1231
      %v1245 = vpack.c.bf16 %v1234, %v1233
      %v1246 = vpack.c.bf16 %v1236, %v1235
      %v1247 = vpack.c.bf16 %v1238, %v1237
      %v1248 = vpack.c.bf16 %v1240, %v1239
      %v1249 = vld [vmem:[%s1] sm:$0xf]
      %v1250 = vld [vmem:[%s1 + $0x4] sm:$0xf]
      %v1251 = vld [vmem:[%s1 + $0x8] sm:$0xf]
      %v1252 = vld [vmem:[%s1 + $0xc] sm:$0xf]
      %v1253 = vld [vmem:[%s1 + $0x10] sm:$0x3]
      %v1254 = vld [vmem:[%s2] sm:$0x1]
      %v1256 = vlaneseq
      %v1257 = vshrl.u32 %v1256, 7
      %v1258 = vsub.s32 0, %v1257
      %v1259 = vrot.slane %v1254, %v1258
      %v1266 = vunpack.c.l.b16 %v1249
      %v1267 = vunpack.c.l.b16 %v1250
      %v1268 = vunpack.c.l.b16 %v1251
      %v1269 = vunpack.c.l.b16 %v1252
      %v1270 = vunpack.c.l.b16 %v1253
      %v1271 = vpack.c.b16 %v1267, %v1266
      %v1272 = vpack.c.b16 %v1269, %v1268
      %v1273 = vpack.c.b16 %v1270, %v1270
      %vm1276 = vcmask 293888
      %v1278 = vsel %vm1276, %v1241, 0
      %v1281 = vsel %vm1276, %v1242, 0
      %v1284 = vsel %vm1276, %v1243, 0
      %v1287 = vsel %vm1276, %v1244, 0
      %v1290 = vsel %vm1276, %v1245, 0
      %v1293 = vsel %vm1276, %v1246, 0
      %v1296 = vsel %vm1276, %v1247, 0
      %v1299 = vsel %vm1276, %v1248, 0
      %vm1301 = vcmask 1041408
      %v1303 = vsel %vm1301, %v1273, 0
      %1305 = vmatprep.subr.bf16.mxu0 0
      %1306 = vmatpush1.bf16.msra.mxu0 0
      %1307 = vmatprep.subr.bf16.mxu0 0
      %1308 = vmatpush1.bf16.msra.mxu0 0
      %1309 = vmatprep.subr.bf16.mxu0 0
      %1310 = vmatpush1.bf16.msra.mxu0 0
      %1311 = vmatprep.subr.bf16.mxu0 0
      %1312 = vmatpush1.bf16.msra.mxu0 0
      %1313 = vmatprep.subr.bf16.mxu0 0
      %1314 = vmatpush1.bf16.msra.mxu0 0
      %1315 = vmatprep.subr.bf16.mxu0 0
      %1316 = vmatpush1.bf16.msra.mxu0 %v1303
      %1317 = vmatprep.subr.bf16.mxu0 0
      %1318 = vmatpush1.bf16.msra.mxu0 %v1272
      %1319 = vmatprep.subr.bf16.mxu0 0
      %1320 = vmatpush1.bf16.msra.mxu0 %v1271
      %1321 = vmatprep.subr.bf16.mxu0 0
      %1322 = vmatpush2.bf16.msra.mxu0 0
      %1323 = vmatprep.subr.bf16.mxu0 0
      %1324 = vmatpush2.bf16.msra.mxu0 0
      %1325 = vmatprep.subr.bf16.mxu0 0
      %1326 = vmatpush2.bf16.msra.mxu0 0
      %1327 = vmatprep.subr.bf16.mxu0 0
      %1328 = vmatpush2.bf16.msra.mxu0 0
      %1329 = vmatprep.subr.bf16.mxu0 0
      %1330 = vmatpush2.bf16.msra.mxu0 0
      %1331 = vmatprep.subr.bf16.mxu0 0
      %1332 = vmatpush2.bf16.msra.mxu0 0
      %1333 = vmatprep.subr.bf16.mxu0 0
      %1334 = vmatpush2.bf16.msra.mxu0 0
      %1335 = vmatprep.subr.bf16.mxu0 0
      %1336 = vmatpush2.bf16.msra.mxu0 0
      %1337 = vmatprep.mubr.bf16.mxu0 0
      %1338 = vmatmul.mubr.bf16.gmra.mxu0 %v1278
      %v1339 = vpop.f32.mrf.mxu0
      %v1340 = vadd.f32 %v1259, %v1339
      %v1341 = vpop.f32.mrf.mxu0
      %v1342 = vpop.f32.mrf.mxu0
      %v1343 = vadd.f32 %v1259, %v1342
      %v1344 = vpop.f32.mrf.mxu0
      %1345 = vmatprep.mubr.bf16.mxu0 0
      %1346 = vmatmul.mubr.bf16.gmra.mxu0 %v1281
      %v1347 = vpop.f32.mrf.mxu0
      %v1348 = vadd.f32 %v1259, %v1347
      %v1349 = vpop.f32.mrf.mxu0
      %v1350 = vpop.f32.mrf.mxu0
      %v1351 = vadd.f32 %v1259, %v1350
      %v1352 = vpop.f32.mrf.mxu0
      %1353 = vmatprep.mubr.bf16.mxu0 0
      %1354 = vmatmul.mubr.bf16.gmra.mxu0 %v1284
      %v1355 = vpop.f32.mrf.mxu0
      %v1356 = vadd.f32 %v1259, %v1355
      %v1357 = vpop.f32.mrf.mxu0
      %v1358 = vpop.f32.mrf.mxu0
      %v1359 = vadd.f32 %v1259, %v1358
      %v1360 = vpop.f32.mrf.mxu0
      %1361 = vmatprep.mubr.bf16.mxu0 0
      %1362 = vmatmul.mubr.bf16.gmra.mxu0 %v1287
      %v1363 = vpop.f32.mrf.mxu0
      %v1364 = vadd.f32 %v1259, %v1363
      %v1365 = vpop.f32.mrf.mxu0
      %v1366 = vpop.f32.mrf.mxu0
      %v1367 = vadd.f32 %v1259, %v1366
      %v1368 = vpop.f32.mrf.mxu0
      %1369 = vmatprep.mubr.bf16.mxu0 0
      %1370 = vmatmul.mubr.bf16.gmra.mxu0 %v1290
      %v1371 = vpop.f32.mrf.mxu0
      %v1372 = vadd.f32 %v1259, %v1371
      %v1373 = vpop.f32.mrf.mxu0
      %v1374 = vpop.f32.mrf.mxu0
      %v1375 = vadd.f32 %v1259, %v1374
      %v1376 = vpop.f32.mrf.mxu0
      %1377 = vmatprep.mubr.bf16.mxu0 0
      %1378 = vmatmul.mubr.bf16.gmra.mxu0 %v1293
      %v1379 = vpop.f32.mrf.mxu0
      %v1380 = vadd.f32 %v1259, %v1379
      %v1381 = vpop.f32.mrf.mxu0
      %v1382 = vpop.f32.mrf.mxu0
      %v1383 = vadd.f32 %v1259, %v1382
      %v1384 = vpop.f32.mrf.mxu0
      %1385 = vmatprep.mubr.bf16.mxu0 0
      %1386 = vmatmul.mubr.bf16.gmra.mxu0 %v1296
      %v1387 = vpop.f32.mrf.mxu0
      %v1388 = vadd.f32 %v1259, %v1387
      %v1389 = vpop.f32.mrf.mxu0
      %v1390 = vpop.f32.mrf.mxu0
      %v1391 = vadd.f32 %v1259, %v1390
      %v1392 = vpop.f32.mrf.mxu0
      %1393 = vmatprep.mubr.bf16.mxu0 0
      %1394 = vmatmul.mubr.bf16.gmra.mxu0 %v1299
      %v1395 = vpop.f32.mrf.mxu0
      %v1396 = vadd.f32 %v1259, %v1395
      %v1397 = vpop.f32.mrf.mxu0
      %v1398 = vpop.f32.mrf.mxu0
      %v1399 = vadd.f32 %v1259, %v1398
      %v1400 = vpop.f32.mrf.mxu0
      %1401 = vdwg.mxu0
      %v1402 = vmax.f32 %v1340, 0.0
      %v1403 = vmax.f32 %v1343, 0.0
      %v1404 = vmax.f32 %v1348, 0.0
      %v1405 = vmax.f32 %v1351, 0.0
      %v1406 = vmax.f32 %v1356, 0.0
      %v1407 = vmax.f32 %v1359, 0.0
      %v1408 = vmax.f32 %v1364, 0.0
      %v1409 = vmax.f32 %v1367, 0.0
      %v1410 = vmax.f32 %v1372, 0.0
      %v1411 = vmax.f32 %v1375, 0.0
      %v1412 = vmax.f32 %v1380, 0.0
      %v1413 = vmax.f32 %v1383, 0.0
      %v1414 = vmax.f32 %v1388, 0.0
      %v1415 = vmax.f32 %v1391, 0.0
      %v1416 = vmax.f32 %v1396, 0.0
      %v1417 = vmax.f32 %v1399, 0.0
      %v1418 = vpack.c.bf16 %v1403, %v1402
      %v1419 = vpack.c.bf16 %v1405, %v1404
      %v1420 = vpack.c.bf16 %v1407, %v1406
      %v1421 = vpack.c.bf16 %v1409, %v1408
      %v1422 = vpack.c.bf16 %v1411, %v1410
      %v1423 = vpack.c.bf16 %v1413, %v1412
      %v1424 = vpack.c.bf16 %v1415, %v1414
      %v1425 = vpack.c.bf16 %v1417, %v1416
      %v1426 = vld [vmem:[%s3] sm:$0xf]
      %v1427 = vld [vmem:[%s3 + $0x4] sm:$0xf]
      %v1428 = vld [vmem:[%s3 + $0x8] sm:$0xf]
      %v1429 = vld [vmem:[%s3 + $0xc] sm:$0xf]
      %v1430 = vld [vmem:[%s3 + $0x10] sm:$0xf]
      %v1431 = vld [vmem:[%s3 + $0x14] sm:$0xf]
      %v1432 = vld [vmem:[%s3 + $0x18] sm:$0xf]
      %v1433 = vld [vmem:[%s3 + $0x1c] sm:$0xf]
      %v1434 = vld [vmem:[%s3 + $0x20] sm:$0xf]
      %v1435 = vld [vmem:[%s3 + $0x24] sm:$0xf]
      %v1436 = vld [vmem:[%s3 + $0x28] sm:$0xf]
      %v1437 = vld [vmem:[%s3 + $0x2c] sm:$0xf]
      %v1438 = vld [vmem:[%s3 + $0x30] sm:$0xf]
      %v1439 = vld [vmem:[%s3 + $0x34] sm:$0xf]
      %v1440 = vld [vmem:[%s3 + $0x38] sm:$0xf]
      %v1441 = vld [vmem:[%s3 + $0x3c] sm:$0xf]
      %v1442 = vld [vmem:[%s4] sm:$0x1]
      %v1444 = vlaneseq
      %v1445 = vshrl.u32 %v1444, 7
      %v1446 = vsub.s32 0, %v1445
      %v1447 = vrot.slane %v1442, %v1446
      %v1465 = vunpack.c.l.b16 %v1426
      %v1466 = vunpack.c.l.b16 %v1427
      %v1467 = vunpack.c.l.b16 %v1428
      %v1468 = vunpack.c.l.b16 %v1429
      %v1469 = vunpack.c.l.b16 %v1430
      %v1470 = vunpack.c.l.b16 %v1431
      %v1471 = vunpack.c.l.b16 %v1432
      %v1472 = vunpack.c.l.b16 %v1433
      %v1473 = vunpack.c.l.b16 %v1434
      %v1474 = vunpack.c.l.b16 %v1435
      %v1475 = vunpack.c.l.b16 %v1436
      %v1476 = vunpack.c.l.b16 %v1437
      %v1477 = vunpack.c.l.b16 %v1438
      %v1478 = vunpack.c.l.b16 %v1439
      %v1479 = vunpack.c.l.b16 %v1440
      %v1480 = vunpack.c.l.b16 %v1441
      %v1481 = vpack.c.b16 %v1466, %v1465
      %v1482 = vpack.c.b16 %v1468, %v1467
      %v1483 = vpack.c.b16 %v1470, %v1469
      %v1484 = vpack.c.b16 %v1472, %v1471
      %v1485 = vpack.c.b16 %v1474, %v1473
      %v1486 = vpack.c.b16 %v1476, %v1475
      %v1487 = vpack.c.b16 %v1478, %v1477
      %v1488 = vpack.c.b16 %v1480, %v1479
      %1497 = vmatprep.subr.bf16.mxu0 0
      %1498 = vmatpush1.bf16.msra.mxu0 %v1488
      %1499 = vmatprep.subr.bf16.mxu0 0
      %1500 = vmatpush1.bf16.msra.mxu0 %v1487
      %1501 = vmatprep.subr.bf16.mxu0 0
      %1502 = vmatpush1.bf16.msra.mxu0 %v1486
      %1503 = vmatprep.subr.bf16.mxu0 0
      %1504 = vmatpush1.bf16.msra.mxu0 %v1485
      %1505 = vmatprep.subr.bf16.mxu0 0
      %1506 = vmatpush1.bf16.msra.mxu0 %v1484
      %1507 = vmatprep.subr.bf16.mxu0 0
      %1508 = vmatpush1.bf16.msra.mxu0 %v1483
      %1509 = vmatprep.subr.bf16.mxu0 0
      %1510 = vmatpush1.bf16.msra.mxu0 %v1482
      %1511 = vmatprep.subr.bf16.mxu0 0
      %1512 = vmatpush1.bf16.msra.mxu0 %v1481
      %1513 = vmatprep.subr.bf16.mxu0 0
      %1514 = vmatpush2.bf16.msra.mxu0 0
      %1515 = vmatprep.subr.bf16.mxu0 0
      %1516 = vmatpush2.bf16.msra.mxu0 0
      %1517 = vmatprep.subr.bf16.mxu0 0
      %1518 = vmatpush2.bf16.msra.mxu0 0
      %1519 = vmatprep.subr.bf16.mxu0 0
      %1520 = vmatpush2.bf16.msra.mxu0 0
      %1521 = vmatprep.subr.bf16.mxu0 0
      %1522 = vmatpush2.bf16.msra.mxu0 0
      %1523 = vmatprep.subr.bf16.mxu0 0
      %1524 = vmatpush2.bf16.msra.mxu0 0
      %1525 = vmatprep.subr.bf16.mxu0 0
      %1526 = vmatpush2.bf16.msra.mxu0 0
      %1527 = vmatprep.subr.bf16.mxu0 0
      %1528 = vmatpush2.bf16.msra.mxu0 0
      %1529 = vmatprep.mubr.bf16.mxu0 0
      %1530 = vmatmul.mubr.bf16.gmra.mxu0 %v1418
      %v1531 = vpop.f32.mrf.mxu0
      %v1532 = vadd.f32 %v1447, %v1531
      %v1533 = vpop.f32.mrf.mxu0
      %v1534 = vpop.f32.mrf.mxu0
      %v1535 = vadd.f32 %v1447, %v1534
      %v1536 = vpop.f32.mrf.mxu0
      %1537 = vmatprep.mubr.bf16.mxu0 0
      %1538 = vmatmul.mubr.bf16.gmra.mxu0 %v1419
      %v1539 = vpop.f32.mrf.mxu0
      %v1540 = vadd.f32 %v1447, %v1539
      %v1541 = vpop.f32.mrf.mxu0
      %v1542 = vpop.f32.mrf.mxu0
      %v1543 = vadd.f32 %v1447, %v1542
      %v1544 = vpop.f32.mrf.mxu0
      %1545 = vmatprep.mubr.bf16.mxu0 0
      %1546 = vmatmul.mubr.bf16.gmra.mxu0 %v1420
      %v1547 = vpop.f32.mrf.mxu0
      %v1548 = vadd.f32 %v1447, %v1547
      %v1549 = vpop.f32.mrf.mxu0
      %v1550 = vpop.f32.mrf.mxu0
      %v1551 = vadd.f32 %v1447, %v1550
      %v1552 = vpop.f32.mrf.mxu0
      %1553 = vmatprep.mubr.bf16.mxu0 0
      %1554 = vmatmul.mubr.bf16.gmra.mxu0 %v1421
      %v1555 = vpop.f32.mrf.mxu0
      %v1556 = vadd.f32 %v1447, %v1555
      %v1557 = vpop.f32.mrf.mxu0
      %v1558 = vpop.f32.mrf.mxu0
      %v1559 = vadd.f32 %v1447, %v1558
      %v1560 = vpop.f32.mrf.mxu0
      %1561 = vmatprep.mubr.bf16.mxu0 0
      %1562 = vmatmul.mubr.bf16.gmra.mxu0 %v1422
      %v1563 = vpop.f32.mrf.mxu0
      %v1564 = vadd.f32 %v1447, %v1563
      %v1565 = vpop.f32.mrf.mxu0
      %v1566 = vpop.f32.mrf.mxu0
      %v1567 = vadd.f32 %v1447, %v1566
      %v1568 = vpop.f32.mrf.mxu0
      %1569 = vmatprep.mubr.bf16.mxu0 0
      %1570 = vmatmul.mubr.bf16.gmra.mxu0 %v1423
      %v1571 = vpop.f32.mrf.mxu0
      %v1572 = vadd.f32 %v1447, %v1571
      %v1573 = vpop.f32.mrf.mxu0
      %v1574 = vpop.f32.mrf.mxu0
      %v1575 = vadd.f32 %v1447, %v1574
      %v1576 = vpop.f32.mrf.mxu0
      %1577 = vmatprep.mubr.bf16.mxu0 0
      %1578 = vmatmul.mubr.bf16.gmra.mxu0 %v1424
      %v1579 = vpop.f32.mrf.mxu0
      %v1580 = vadd.f32 %v1447, %v1579
      %v1581 = vpop.f32.mrf.mxu0
      %v1582 = vpop.f32.mrf.mxu0
      %v1583 = vadd.f32 %v1447, %v1582
      %v1584 = vpop.f32.mrf.mxu0
      %1585 = vmatprep.mubr.bf16.mxu0 0
      %1586 = vmatmul.mubr.bf16.gmra.mxu0 %v1425
      %v1587 = vpop.f32.mrf.mxu0
      %v1588 = vadd.f32 %v1447, %v1587
      %v1589 = vpop.f32.mrf.mxu0
      %v1590 = vpop.f32.mrf.mxu0
      %v1591 = vadd.f32 %v1447, %v1590
      %v1592 = vpop.f32.mrf.mxu0
      %1593 = vdwg.mxu0
      %1594 = vst [vmem:[%s248] sm:$0xff] %v1532
      %1595 = vst [vmem:[%s248 + $0x8] sm:$0xff] %v1535
      %1596 = vst [vmem:[%s248 + $0x10] sm:$0xff] %v1540
      %1597 = vst [vmem:[%s248 + $0x18] sm:$0xff] %v1543
      %1598 = vst [vmem:[%s248 + $0x20] sm:$0xff] %v1548
      %1599 = vst [vmem:[%s248 + $0x28] sm:$0xff] %v1551
      %1600 = vst [vmem:[%s248 + $0x30] sm:$0xff] %v1556
      %1601 = vst [vmem:[%s248 + $0x38] sm:$0xff] %v1559
      %1602 = vst [vmem:[%s248 + $0x40] sm:$0xff] %v1564
      %1603 = vst [vmem:[%s248 + $0x48] sm:$0xff] %v1567
      %1604 = vst [vmem:[%s248 + $0x50] sm:$0xff] %v1572
      %1605 = vst [vmem:[%s248 + $0x58] sm:$0xff] %v1575
      %1606 = vst [vmem:[%s248 + $0x60] sm:$0xff] %v1580
      %1607 = vst [vmem:[%s248 + $0x68] sm:$0xff] %v1583
      %1608 = vst [vmem:[%s248 + $0x70] sm:$0xff] %v1588
      %1609 = vst [vmem:[%s248 + $0x78] sm:$0xff] %v1591
      %s1610 = smul.u32 8, %s21
      %p1611 = scmp.lt.s32.totalorder %s20, 1
      %s1612 = scalar_select %p1611, %s20, 1
      %p1613 = scmp.lt.s32.totalorder %s1610, 15
      %s1614 = scalar_select %p1613, %s1610, 15
      %s1615 = smul.addr %s1614, 2
      %s1616 = smul.addr %s1612, 32
      %s1617 = sadd.s32 %s1615, %s1616
      %s1618 = smul.addr %s1617, 8
      %s1619 = scalar_lea.vmem %s5, %s1618
      // Predicated region
      $region41: #{bisenet_output.1} parent=39 // pred_check
        %p1620 = pneg %p158
      $region42: #{bisenet_output.1} parent=39 // pred_check_branch
        %1622 = sbr.rel (%p1620) target = $region44
      $region43: #{bisenet_output.1} parent=39 // pred_region
        %s1623 = smul.u32 8, %s21
      $region44: #{bisenet_output.1} parent=39 // pred_fallthru
        _
    $region40: #{bisenet_output.1} parent=5 // pred_fallthru
      _
    %p1624 = scmp.le.s32.totalorder 2, %s11
    // Predicated region
    $region45: #{bisenet_output.1} parent=5 // pred_check
      %p1625 = pneg %p1624
    $region46: #{bisenet_output.1} parent=5 // pred_check_branch
      %1627 = sbr.rel (%p1625) target = $region48
    $region47: #{bisenet_output.1} parent=5 // pred_region
      %s1628 = ssub.s32 %s11, 2
      // Predicated region
      $region49: #{bisenet_output.1} parent=47 // pred_check
        %p1629 = pneg %p164
      $region50: #{bisenet_output.1} parent=47 // pred_check_branch
        %1631 = sbr.rel (%p1629) target = $region52
      $region51: #{bisenet_output.1} parent=47 // pred_region
        %s1632 = smul.u32 8, %s23
        %p1633 = scmp.lt.s32.totalorder %s22, 1
        %s1634 = scalar_select %p1633, %s22, 1
        %p1635 = scmp.lt.s32.totalorder %s1632, 15
        %s1636 = scalar_select %p1635, %s1632, 15
        %s1637 = smul.addr %s1636, 2
        %s1638 = smul.addr %s1634, 32
        %s1639 = sadd.s32 %s1637, %s1638
        %s1640 = smul.addr %s1639, 8
        %s1641 = scalar_lea.vmem %s5, %s1640
      $region52: #{bisenet_output.1} parent=47 // pred_fallthru
        _
    $region48: #{bisenet_output.1} parent=5 // pred_fallthru
      _
  $region6: #{bisenet_output.1} parent=0 // loop_footer
    %s15 = sadd.s32 1, %s11
  $region7: #{bisenet_output.1} parent=0 // loop_footer_branch
    %10 = sbr.rel target = $region3
  $region8: #{bisenet_output.1} parent=0 // loop_exit
    _

</llo_original>
